<compile_context>
chip_gen: v5e
topology: v5e:2x2
jax: 0.10.0
libtpu: 0.0.40
codegen_flags: <defaults>
</compile_context>

<pallas_src>
import math
from functools import partial

import jax
import jax.numpy as jnp
from jax.experimental import pallas as pl
from jax.experimental.pallas import tpu as pltpu


# ----------------------------- small helpers -----------------------------


def _round_up(v, m):
    return ((v + m - 1) // m) * m


def _cpad(c):
    return _round_up(c, 128)


def _sigmoid(z):
    return 1.0 / (1.0 + jnp.exp(-z))


def _apply_act(y, act):
    if act == "relu":
        return jnp.maximum(y, 0.0)
    if act == "swish":
        return y * _sigmoid(y)
    if act == "sigmoid":
        return _sigmoid(y)
    return y


def _full_spec(shape):
    n = len(shape)
    return pl.BlockSpec(shape, lambda i, _n=n: (0,) * _n)


def _same_pads(size, k, s):
    # TensorFlow-style SAME padding (what efficientnet-pytorch's static-same-padding does).
    out = -(-size // s)
    pad = max((out - 1) * s + k - size, 0)
    return pad // 2, pad - pad // 2


def _pick_tile(total, cap, min_blocks=1):
    """Largest multiple-of-128 divisor of `total` <= cap, preferring >= min_blocks blocks."""
    divs = [t for t in range(128, min(cap, total) + 1, 128) if total % t == 0]
    good = [t for t in divs if total // t >= min_blocks]
    return max(good) if good else max(divs)


# ----------------------------- Pallas kernels -----------------------------


def _mm_kernel(a_ref, w_ref, b_ref, o_ref, acc_ref, *, act, post_act):
    """Tiled matmul: f32 VMEM accumulator; bias/activation epilogue only at k == last."""
    @pl.when(pl.program_id(2) == 0)
    def _init():
        acc_ref[...] = jnp.zeros_like(acc_ref)

    acc_ref[...] += jnp.dot(a_ref[...], w_ref[...],
                            preferred_element_type=jnp.float32)

    @pl.when(pl.program_id(2) == pl.num_programs(2) - 1)
    def _epilogue():
        y = _apply_act(acc_ref[...] + b_ref[...], act)
        o_ref[...] = _apply_act(y, post_act).astype(o_ref.dtype)


def _mm_res_kernel(a_ref, w_ref, b_ref, r_ref, o_ref, acc_ref, *, act, post_act):
    """Same as _mm_kernel but adds a residual tile after `act`, then applies `post_act`."""
    @pl.when(pl.program_id(2) == 0)
    def _init():
        acc_ref[...] = jnp.zeros_like(acc_ref)

    acc_ref[...] += jnp.dot(a_ref[...], w_ref[...],
                            preferred_element_type=jnp.float32)

    @pl.when(pl.program_id(2) == pl.num_programs(2) - 1)
    def _epilogue():
        y = _apply_act(acc_ref[...] + b_ref[...], act) + r_ref[...].astype(jnp.float32)
        o_ref[...] = _apply_act(y, post_act).astype(o_ref.dtype)


def _dwconv_swish_kernel(x_ref, w_ref, b_ref, o_ref, *, k):
    """Depthwise kxk conv (stride-1 over the SAME-padded frame) + folded BN + swish.

    bf16 in / bf16 out, math in f32 (v5e has no bf16 VALU/EUP).  The width-axis
    (sublane) shift is hoisted out of the ki loop so only k shifted copies are
    materialized instead of k*k.
    """
    _, hp, wp, c = x_ref.shape
    ho, wo = hp - k + 1, wp - k + 1
    x = x_ref[...].astype(jnp.float32)
    acc = jnp.zeros((1, ho, wo, c), jnp.float32)
    for kj in range(k):
        xj = x[:, :, kj:kj + wo, :]              # one sublane shift per kj, reused over ki
        for ki in range(k):
            wk = w_ref[ki * k + kj, :].reshape(1, 1, 1, c)
            acc = acc + xj[:, ki:ki + ho, :, :] * wk
    y = acc + b_ref[0, :].reshape(1, 1, 1, c)
    o_ref[...] = (y * _sigmoid(y)).astype(o_ref.dtype)


def _se_project_kernel(x_ref, w1_ref, b1_ref, w2_ref, b2_ref, wp_ref, bp_ref, o_ref):
    """Fused SE (global pool -> FC swish -> FC sigmoid -> channel scale) + project 1x1 conv."""
    x = x_ref[0].astype(jnp.float32)                                  # (hw, cexp)
    pooled = jnp.mean(x, axis=0, keepdims=True)                       # (1, cexp) f32
    s1 = jnp.dot(pooled.astype(jnp.bfloat16), w1_ref[...],
                 preferred_element_type=jnp.float32) + b1_ref[...]
    s1 = s1 * _sigmoid(s1)                                            # swish
    s2 = jnp.dot(s1.astype(jnp.bfloat16), w2_ref[...],
                 preferred_element_type=jnp.float32) + b2_ref[...]
    se = _sigmoid(s2)                                                 # (1, cexp)
    a = (x * se).astype(jnp.bfloat16)
    y = jnp.dot(a, wp_ref[...], preferred_element_type=jnp.float32) + bp_ref[...]
    o_ref[0] = y.astype(o_ref.dtype)


def _se_project_res_kernel(x_ref, w1_ref, b1_ref, w2_ref, b2_ref, wp_ref, bp_ref,
                           r_ref, o_ref):
    """Same as _se_project_kernel plus the MBConv identity skip fused into the epilogue."""
    x = x_ref[0].astype(jnp.float32)
    pooled = jnp.mean(x, axis=0, keepdims=True)
    s1 = jnp.dot(pooled.astype(jnp.bfloat16), w1_ref[...],
                 preferred_element_type=jnp.float32) + b1_ref[...]
    s1 = s1 * _sigmoid(s1)
    s2 = jnp.dot(s1.astype(jnp.bfloat16), w2_ref[...],
                 preferred_element_type=jnp.float32) + b2_ref[...]
    se = _sigmoid(s2)
    a = (x * se).astype(jnp.bfloat16)
    y = jnp.dot(a, wp_ref[...], preferred_element_type=jnp.float32) + bp_ref[...]
    y = y + r_ref[0].astype(jnp.float32)
    o_ref[0] = y.astype(o_ref.dtype)


def _head_kernel(h_ref, w_ref, b_ref, o_ref, *, num_classes):
    """Final Linear + softmax over the real (unpadded) classes, fused."""
    logits = (jnp.dot(h_ref[...], w_ref[...], preferred_element_type=jnp.float32)
              + b_ref[...])
    col = jax.lax.broadcasted_iota(jnp.int32, logits.shape, 1)
    logits = jnp.where(col < num_classes, logits, -1e30)   # mask padded class lanes
    z = logits - jnp.max(logits, axis=-1, keepdims=True)
    e = jnp.exp(z)
    o_ref[...] = (e / jnp.sum(e, axis=-1, keepdims=True)).astype(o_ref.dtype)


# ----------------------------- wrappers (pallas_call) -----------------------------

_TM, _TN_CAP, _TK_CAP = 256, 512, 2304


@partial(jax.jit, static_argnames=("act", "post_act"))
def pallas_matmul(a, w, b, residual=None, *, act="none", post_act="none"):
    """post_act(act(a @ w + b) [+ residual]); bf16 MXU operands, f32 accumulation, bf16 out.

    `w` is a pre-padded (Kp, Np) bf16 weight and `b` a pre-padded (1, Np) f32 bias
    (padding hoisted to init time); activations carry 128-padded channels, so only the
    tiny stem im2col (K=27) ever needs K padding here.
    """
    M = a.shape[0]
    Kp, Np = w.shape
    if a.shape[1] < Kp:                               # stem im2col only
        a = jnp.pad(a, ((0, 0), (0, Kp - a.shape[1])))
    a = a.astype(jnp.bfloat16)

    tm = min(_TM, _round_up(M, 8))
    Mp = _round_up(M, tm)
    # keep >= 2 N-blocks when there is a single M-block so both v7x TensorCores get work
    min_nb = 2 if Mp // tm == 1 else 1
    tn = _pick_tile(Np, _TN_CAP, min_nb)
    tk = Kp if Kp <= _TK_CAP else _pick_tile(Kp, 1024, 1)

    if Mp > M:
        a = jnp.pad(a, ((0, Mp - M), (0, 0)))

    grid = (Mp // tm, Np // tn, Kp // tk)
    a_spec = pl.BlockSpec((tm, tk), lambda i, j, kk: (i, kk))
    w_spec = pl.BlockSpec((tk, tn), lambda i, j, kk: (kk, j))
    b_spec = pl.BlockSpec((1, tn), lambda i, j, kk: (0, j))
    o_spec = pl.BlockSpec((tm, tn), lambda i, j, kk: (i, j))

    bytes_accessed = 2 * (Mp * Kp + Kp * Np + Mp * Np) + 4 * Np
    if residual is not None:
        bytes_accessed += 2 * Mp * Np
    common = dict(
        out_shape=jax.ShapeDtypeStruct((Mp, Np), jnp.bfloat16),
        grid=grid,
        out_specs=o_spec,
        scratch_shapes=[pltpu.VMEM((tm, tn), jnp.float32)],
        compiler_params=pltpu.CompilerParams(
            dimension_semantics=("parallel", "parallel", "arbitrary")),
        cost_estimate=pl.CostEstimate(flops=2 * Mp * Np * Kp,
                                      transcendentals=0,
                                      bytes_accessed=bytes_accessed),
    )
    if residual is None:
        out = pl.pallas_call(
            partial(_mm_kernel, act=act, post_act=post_act),
            in_specs=[a_spec, w_spec, b_spec], **common,
        )(a, w, b)
    else:
        r = residual.astype(jnp.bfloat16)
        if Mp > M:
            r = jnp.pad(r, ((0, Mp - M), (0, 0)))
        out = pl.pallas_call(
            partial(_mm_res_kernel, act=act, post_act=post_act),
            in_specs=[a_spec, w_spec, b_spec, o_spec], **common,
        )(a, w, b, r)
    return out[:M] if Mp > M else out


@partial(jax.jit, static_argnames=("k", "stride"))
def depthwise_conv_swish(x, w, b, *, k, stride):
    """Depthwise kxk SAME conv + folded BN + swish; NHWC bf16 in/out, one frame per grid step."""
    n, h, ww, c = x.shape
    ph = _same_pads(h, k, stride)
    pw = _same_pads(ww, k, stride)
    xp = jnp.pad(x, ((0, 0), ph, pw, (0, 0)))
    hp, wp = xp.shape[1], xp.shape[2]
    ho, wo = hp - k + 1, wp - k + 1
    # TODO(synk): at real b3 resolutions the per-frame block should be row-tiled to stay
    #             inside v7x's smaller VMEM; whole-frame blocks are fine at these toy sizes.
    y = pl.pallas_call(
        partial(_dwconv_swish_kernel, k=k),
        out_shape=jax.ShapeDtypeStruct((n, ho, wo, c), jnp.bfloat16),
        grid=(n,),
        in_specs=[pl.BlockSpec((1, hp, wp, c), lambda i: (i, 0, 0, 0)),
                  pl.BlockSpec((k * k, c), lambda i: (0, 0)),
                  pl.BlockSpec((1, c), lambda i: (0, 0))],
        out_specs=pl.BlockSpec((1, ho, wo, c), lambda i: (i, 0, 0, 0)),
        compiler_params=pltpu.CompilerParams(dimension_semantics=("parallel",)),
    )(xp, w, b)
    if stride > 1:
        # TODO(synk): stride is still folded outside the kernel (stride-1 compute +
        #             subsample) to avoid in-kernel strided sublane slices; negligible
        #             at these spatial sizes.
        y = y[:, ::stride, ::stride, :]
    return y


def se_project(x, blk, residual=None):
    """Fused SE + channel scale + project 1x1 conv (+ identity residual), grid over frames."""
    x = x.astype(jnp.bfloat16)
    n, hw, ce = x.shape
    co = blk["project"]["w"].shape[1]
    full2 = lambda s: pl.BlockSpec(s, lambda i: (0, 0))
    in_specs = [pl.BlockSpec((1, hw, ce), lambda i: (i, 0, 0)),
                full2(blk["se_reduce"]["w"].shape), full2(blk["se_reduce"]["b"].shape),
                full2(blk["se_expand"]["w"].shape), full2(blk["se_expand"]["b"].shape),
                full2(blk["project"]["w"].shape), full2(blk["project"]["b"].shape)]
    args = [x, blk["se_reduce"]["w"], blk["se_reduce"]["b"],
            blk["se_expand"]["w"], blk["se_expand"]["b"],
            blk["project"]["w"], blk["project"]["b"]]
    kernel = _se_project_kernel
    if residual is not None:
        in_specs.append(pl.BlockSpec((1, hw, co), lambda i: (i, 0, 0)))
        args.append(residual.astype(jnp.bfloat16))
        kernel = _se_project_res_kernel
    return pl.pallas_call(
        kernel,
        out_shape=jax.ShapeDtypeStruct((n, hw, co), jnp.bfloat16),
        grid=(n,),
        in_specs=in_specs,
        out_specs=pl.BlockSpec((1, hw, co), lambda i: (i, 0, 0)),
        compiler_params=pltpu.CompilerParams(dimension_semantics=("parallel",)),
    )(*args)


@partial(jax.jit, static_argnames=("num_classes",))
def classify_head(h, w, b, *, num_classes):
    bsz, fin = h.shape
    ncp = w.shape[1]
    return pl.pallas_call(
        partial(_head_kernel, num_classes=num_classes),
        out_shape=jax.ShapeDtypeStruct((bsz, ncp), jnp.float32),
        grid=(1,),
        in_specs=[_full_spec((bsz, fin)), _full_spec((fin, ncp)), _full_spec((1, ncp))],
        out_specs=_full_spec((bsz, ncp)),
    )(h.astype(jnp.bfloat16), w, b)


# ----------------------------- conv glue (JAX-side layout only) -----------------------------


def _conv1x1_bn(x, p, act="none"):
    # a 1x1 conv is a pure reshape -> matmul; BN folded into (w, b) at init.
    n, h, w_, c = x.shape
    y = pallas_matmul(x.reshape(n * h * w_, c), p["w"], p["b"], act=act)
    return y.reshape(n, h, w_, -1)


def _im2col(xp, k, stride):
    n, hp, wp, c = xp.shape
    ho = (hp - k) // stride + 1
    wo = (wp - k) // stride + 1
    cols = []
    for i in range(k):
        for j in range(k):
            cols.append(xp[:, i:i + stride * (ho - 1) + 1:stride,
                            j:j + stride * (wo - 1) + 1:stride, :])
    return jnp.concatenate(cols, axis=-1), ho, wo


def _stem_conv(x, p):
    # The 3x3/stride-2 stem is the only dense k>1 conv in EfficientNet; its im2col is
    # only 27 columns (Cin=3), so the patch tensor is tiny.
    n, h, w_, _ = x.shape
    ph = _same_pads(h, 3, 2)
    pw = _same_pads(w_, 3, 2)
    xp = jnp.pad(x, ((0, 0), ph, pw, (0, 0)))
    patches, ho, wo = _im2col(xp, 3, 2)
    a = patches.reshape(n * ho * wo, -1)
    y = pallas_matmul(a, p["w"], p["b"], act="swish")
    return y.reshape(n, ho, wo, -1)


# ----------------------------- EfficientNet-b3 forward -----------------------------


def _mbconv_forward(x, blk):
    inputs = x
    if blk["expand_ratio"] != 1:
        x = _conv1x1_bn(x, blk["expand_conv"], act="swish")
    x = depthwise_conv_swish(x, blk["dw"]["w"], blk["dw"]["b"],
                             k=blk["k"], stride=blk["s"])
    n, h, w_, ce = x.shape
    res = None
    if blk["s"] == 1 and blk["cin"] == blk["cout"]:
        res = inputs.reshape(n, h * w_, -1)
    # TODO(synk): drop_connect is eval-mode identity.
    y = se_project(x.reshape(n, h * w_, ce), blk, residual=res)
    return y.reshape(n, h, w_, -1)


def _efficientnet_features(frames_nhwc, ep):
    x = _stem_conv(frames_nhwc, ep["stem"])
    for blk in ep["blocks"]:
        x = _mbconv_forward(x, blk)
    x = _conv1x1_bn(x, ep["head"], act="swish")
    x = jnp.mean(x.astype(jnp.float32), axis=(1, 2)).astype(jnp.bfloat16)   # pool(1,1)+flatten
    # TODO(synk): feature_model._fc (1536 -> num_classes=500) is skipped: the reference
    #             forward feeds the 1536-d pooled features into fc_pre = Linear(1536, fc_size),
    #             which only type-checks if the pooled features are used.
    return x


# ----------------------------- TCN forward -----------------------------


def _causal_conv1d(x, w, b, *, dilation, k, act, residual=None, post_act="none"):
    # dilated causal Conv1d(k) + chomp == one matmul over the concat of k left-shifted copies.
    bsz, t, cin = x.shape
    cols = []
    for j in range(k):
        shift = (k - 1 - j) * dilation
        cols.append(x if shift == 0 else
                    jnp.pad(x, ((0, 0), (shift, 0), (0, 0)))[:, :t, :])
    a = jnp.concatenate(cols, axis=-1).reshape(bsz * t, k * cin)
    r = None if residual is None else residual.reshape(bsz * t, -1)
    y = pallas_matmul(a, w, b, r, act=act, post_act=post_act)
    return y.reshape(bsz, t, -1)


def _temporal_block(x, blk):
    # TODO(synk): weight_norm is only a reparameterization and Dropout is eval-mode identity.
    bsz, t, _ = x.shape
    d, k = blk["dilation"], blk["k"]
    res = x
    if "downsample" in blk:
        res = pallas_matmul(x.reshape(bsz * t, -1), blk["downsample"]["w"],
                            blk["downsample"]["b"]).reshape(bsz, t, -1)
    h = _causal_conv1d(x, blk["conv1"]["w"], blk["conv1"]["b"],
                       dilation=d, k=k, act="relu")
    # conv2 -> relu -> (+ residual) -> relu fused into one matmul epilogue
    return _causal_conv1d(h, blk["conv2"]["w"], blk["conv2"]["b"],
                          dilation=d, k=k, act="relu", residual=res, post_act="relu")


# ----------------------------- parameters (deterministic, synthetic, pre-padded) -----------------------------


class _KeyGen:
    def __init__(self, key):
        self._key = key
        self._i = 0

    def __call__(self):
        k = jax.random.fold_in(self._key, self._i)
        self._i += 1
        return k


def _round_filters(f, width=1.2, divisor=8):
    f = f * width
    new_f = max(divisor, int(f + divisor / 2) // divisor * divisor)
    if new_f < 0.9 * f:
        new_f += divisor
    return int(new_f)


def _round_repeats(r, depth=1.4):
    return int(math.ceil(depth * r))


_B0_BLOCKS = [  # (expand, kernel, stride, in_filters, out_filters, repeats)
    (1, 3, 1, 32, 16, 1), (6, 3, 2, 16, 24, 2), (6, 5, 2, 24, 40, 2),
    (6, 3, 2, 40, 80, 3), (6, 5, 1, 80, 112, 3), (6, 5, 2, 112, 192, 4),
    (6, 3, 1, 192, 320, 1),
]


def _effnet_b3_block_args():
    args = []
    for expand, k, s, cin, cout, reps in _B0_BLOCKS:
        cin_r, cout_r = _round_filters(cin), _round_filters(cout)
        for r in range(_round_repeats(reps)):
            args.append(dict(expand=expand, k=k, s=s if r == 0 else 1,
                             cin=cin_r if r == 0 else cout_r, cout=cout_r))
    return args


_BN_SCALE = 1.0 / math.sqrt(1.0 + 1e-3)   # eval-mode BN (gamma=1, var=1, mean=0) folded


def _make_dense(kg, fin, fout, *, scale=1.0):
    """Random (fin, fout) weight + bias, zero-padded once at init into a bf16 (Kp, Np)
    weight and f32 (1, Np) bias — no per-call pad/cast passes in the kernels."""
    kp, np_ = _cpad(fin), _cpad(fout)
    w = jax.random.normal(kg(), (fin, fout), jnp.float32) * (scale / math.sqrt(fin))
    b = jax.random.normal(kg(), (fout,), jnp.float32) * 0.01
    wp = jnp.zeros((kp, np_), jnp.bfloat16).at[:fin, :fout].set(w.astype(jnp.bfloat16))
    bp = jnp.zeros((1, np_), jnp.float32).at[:, :fout].set(b)
    return {"w": wp, "b": bp}


def _make_conv_bn(kg, fan_in, cout):
    return _make_dense(kg, fan_in, cout, scale=_BN_SCALE)


def _make_dw_bn(kg, k, c):
    cp = _cpad(c)
    w = jax.random.normal(kg(), (k * k, c), jnp.float32) * (_BN_SCALE / math.sqrt(k * k))
    beta = jax.random.normal(kg(), (c,), jnp.float32) * 0.01
    wp = jnp.zeros((k * k, cp), jnp.float32).at[:, :c].set(w)
    bp = jnp.zeros((1, cp), jnp.float32).at[:, :c].set(beta)
    return {"w": wp, "b": bp}


def _make_kconv(kg, k, cin, cout):
    """TCN k-tap causal conv weight laid out for the padded-channel im2col (k blocks of cin_pad rows)."""
    cinp, coutp = _cpad(cin), _cpad(cout)
    wp = jnp.zeros((k * cinp, coutp), jnp.bfloat16)
    for j in range(k):
        wj = jax.random.normal(kg(), (cin, cout), jnp.float32) / math.sqrt(k * cin)
        wp = wp.at[j * cinp:j * cinp + cin, :cout].set(wj.astype(jnp.bfloat16))
    b = jax.random.normal(kg(), (cout,), jnp.float32) * 0.01
    bp = jnp.zeros((1, coutp), jnp.float32).at[:, :cout].set(b)
    return {"w": wp, "b": bp}


def _make_mbconv(kg, *, expand, k, s, cin, cout):
    cexp = cin * expand
    blk = {"expand_ratio": expand, "k": k, "s": s, "cin": cin, "cout": cout}
    if expand != 1:
        blk["expand_conv"] = _make_conv_bn(kg, cin, cexp)
    blk["dw"] = _make_dw_bn(kg, k, cexp)
    cse = max(1, int(cin * 0.25))
    blk["se_reduce"] = _make_dense(kg, cexp, cse)
    blk["se_expand"] = _make_dense(kg, cse, cexp)
    blk["project"] = _make_conv_bn(kg, cexp, cout)
    return blk


def _make_tcn(kg, input_size, num_channels, k_size):
    blocks = []
    cin = input_size
    for i, cout in enumerate(num_channels):
        blk = {"dilation": 2 ** i, "k": k_size,
               "conv1": _make_kconv(kg, k_size, cin, cout),
               "conv2": _make_kconv(kg, k_size, cout, cout)}
        if cin != cout:
            blk["downsample"] = _make_dense(kg, cin, cout)
        blocks.append(blk)
        cin = cout
    return blocks


def init_params(key, num_classes, hidden_size, fc_size, k_size=2, level_size=5):
    kg = _KeyGen(key)
    stem_out = _round_filters(32)      # 40
    head_out = _round_filters(1280)    # 1536 (== fc_pre input size in the spec)
    eff = {"stem": _make_conv_bn(kg, 3 * 3 * 3, stem_out)}
    blocks = [_make_mbconv(kg, **cfg) for cfg in _effnet_b3_block_args()]
    eff["blocks"] = blocks
    eff["head"] = _make_conv_bn(kg, blocks[-1]["cout"], head_out)
    num_chans = [hidden_size] * (level_size - 1) + [fc_size]
    return {"eff": eff,
            "fc_pre": _make_dense(kg, head_out, fc_size),      # nn.Linear(1536, fc_size)
            "tcn": _make_tcn(kg, fc_size, num_chans, k_size),
            "fc": _make_dense(kg, fc_size, num_classes),
            "num_classes": num_classes}


# ----------------------------- forward -----------------------------


def efficientnet_tcn_forward(x, params):
    x = jnp.squeeze(x, axis=2)                     # torch `x.squeeze(2)` (targeted axis)
    bsz, t, c, h, w_ = x.shape
    frames = jnp.transpose(x.reshape(bsz * t, c, h, w_), (0, 2, 3, 1))   # NCHW -> NHWC
    feat = _efficientnet_features(frames, params["eff"])                 # (B*T, 1536) bf16
    # fc_pre: Linear(1536, fc_size) + Dropout (eval-mode identity)
    z = pallas_matmul(feat, params["fc_pre"]["w"], params["fc_pre"]["b"])
    # torch transposes to (B, C, T) for Conv1d; we keep channels-last (layout only).
    y = z.reshape(bsz, t, -1)
    for blk in params["tcn"]:
        y = _temporal_block(y, blk)
    # TODO(synk): the repo's TCN head is not in the spec; the standard locuslab TCN
    #             classifier (Linear on the last time step + softmax) is used here.
    probs = classify_head(y[:, -1, :], params["fc"]["w"], params["fc"]["b"],
                          num_classes=params["num_classes"])
    return probs[:, :params["num_classes"]]


if __name__ == "__main__":
    num_classes, hidden_size, fc_size = 7, 32, 64
    B, T, C, H, W = 2, 4, 3, 32, 32

    key = jax.random.PRNGKey(0)
    params = init_params(jax.random.fold_in(key, 1), num_classes, hidden_size, fc_size)
    # model input: (B, T, 1, C, H, W); the forward starts with x.squeeze(2)
    x = jax.random.normal(jax.random.fold_in(key, 2), (B, T, 1, C, H, W), jnp.float32)

    fwd = jax.jit(lambda inp: efficientnet_tcn_forward(inp, params))
    out = jax.block_until_ready(fwd(x))

    assert out.shape == (B, num_classes), out.shape
    assert bool(jnp.all(jnp.isfinite(out)))
    assert bool(jnp.allclose(jnp.sum(out, axis=-1), 1.0, atol=1e-4))
    print("KERNEL_OK")
</pallas_src>

<mosaic_0001>
module attributes {stable_mosaic.version = 11 : i64} {
  func.func @_mm_kernel(%arg0: i32, %arg1: i32, %arg2: i32, %arg3: memref<256x128xbf16, #tpu.memory_space<vmem>>, %arg4: memref<128x128xbf16, #tpu.memory_space<vmem>>, %arg5: memref<1x128xf32, #tpu.memory_space<vmem>>, %arg6: memref<256x128xbf16, #tpu.memory_space<vmem>>, %arg7: memref<256x128xf32, #tpu.memory_space<vmem>>) attributes {dimension_semantics = [#tpu.dimension_semantics<parallel>, #tpu.dimension_semantics<parallel>, #tpu.dimension_semantics<arbitrary>], iteration_bounds = array<i64: 8, 1, 1>, scalar_prefetch = 0 : i64, scratch_operands = 1 : i64, tpu.core_type = #tpu.core_type<tc>, window_params = [{transform_indices = @transform_0, window_bounds = array<i64: 256, 128>}, {transform_indices = @transform_1, window_bounds = array<i64: 128, 128>}, {transform_indices = @transform_2, window_bounds = array<i64: 1, 128>}, {transform_indices = @transform_3, window_bounds = array<i64: 256, 128>}]} {
    %c0_i32 = arith.constant 0 : i32
    %0 = arith.cmpi eq, %arg2, %c0_i32 : i32
    %1 = arith.extui %0 : i1 to i32
    %c0_i32_0 = arith.constant 0 : i32
    %2 = arith.cmpi ne, %1, %c0_i32_0 : i32
    scf.if %2 {
      %cst_10 = arith.constant 0.000000e+00 : f32
      %12 = vector.broadcast %cst_10 : f32 to vector<256x128xf32>
      %c0_11 = arith.constant 0 : index
      %c0_12 = arith.constant 0 : index
      %13 = vector.load %arg7[%c0_11, %c0_12] : memref<256x128xf32, #tpu.memory_space<vmem>>, vector<256x128xf32>
      tpu.vector_store %arg7[%c0_11, %c0_12], %12 {strides = array<i32>} : memref<256x128xf32, #tpu.memory_space<vmem>>, vector<256x128xf32>,
    } else {
    }
    %c0 = arith.constant 0 : index
    %c0_1 = arith.constant 0 : index
    %3 = vector.load %arg7[%c0, %c0_1] : memref<256x128xf32, #tpu.memory_space<vmem>>, vector<256x128xf32>
    %c0_2 = arith.constant 0 : index
    %c0_3 = arith.constant 0 : index
    %4 = vector.load %arg3[%c0_2, %c0_3] : memref<256x128xbf16, #tpu.memory_space<vmem>>, vector<256x128xbf16>
    %c0_4 = arith.constant 0 : index
    %c0_5 = arith.constant 0 : index
    %5 = vector.load %arg4[%c0_4, %c0_5] : memref<128x128xbf16, #tpu.memory_space<vmem>>, vector<128x128xbf16>
    %cst = arith.constant dense<0.000000e+00> : vector<256x128xf32>
    %6 = tpu.matmul %4, %5, %cst {dimension_numbers = #tpu.dot_dimension_numbers<[1], [0], [0], [1], [0, 0, 1, 1], [], []>} : vector<256x128xbf16>, vector<128x128xbf16>, vector<256x128xf32> -> vector<256x128xf32>
    %7 = arith.addf %3, %6 : vector<256x128xf32>
    %c0_6 = arith.constant 0 : index
    %c0_7 = arith.constant 0 : index
    %8 = vector.load %arg7[%c0_6, %c0_7] : memref<256x128xf32, #tpu.memory_space<vmem>>, vector<256x128xf32>
    tpu.vector_store %arg7[%c0_6, %c0_7], %7 {strides = array<i32>} : memref<256x128xf32, #tpu.memory_space<vmem>>, vector<256x128xf32>,
    %c0_i32_8 = arith.constant 0 : i32
    %9 = arith.cmpi eq, %arg2, %c0_i32_8 : i32
    %10 = arith.extui %9 : i1 to i32
    %c0_i32_9 = arith.constant 0 : i32
    %11 = arith.cmpi ne, %10, %c0_i32_9 : i32
    scf.if %11 {
      %c0_10 = arith.constant 0 : index
      %c0_11 = arith.constant 0 : index
      %12 = vector.load %arg7[%c0_10, %c0_11] : memref<256x128xf32, #tpu.memory_space<vmem>>, vector<256x128xf32>
      %c0_12 = arith.constant 0 : index
      %c0_13 = arith.constant 0 : index
      %13 = vector.load %arg5[%c0_12, %c0_13] : memref<1x128xf32, #tpu.memory_space<vmem>>, vector<1x128xf32>
      %14 = vector.broadcast %13 : vector<1x128xf32> to vector<256x128xf32>
      %15 = arith.addf %12, %14 : vector<256x128xf32>
      %cst_14 = arith.constant 0.000000e+00 : f32
      %16 = vector.broadcast %cst_14 : f32 to vector<256x128xf32>
      %17 = arith.subf %16, %15 : vector<256x128xf32>
      %18 = math.exp %17 : vector<256x128xf32>
      %cst_15 = arith.constant 1.000000e+00 : f32
      %19 = vector.broadcast %cst_15 : f32 to vector<256x128xf32>
      %20 = arith.addf %19, %18 : vector<256x128xf32>
      %cst_16 = arith.constant 1.000000e+00 : f32
      %21 = vector.broadcast %cst_16 : f32 to vector<256x128xf32>
      %22 = arith.divf %21, %20 : vector<256x128xf32>
      %23 = arith.mulf %15, %22 : vector<256x128xf32>
      %24 = arith.truncf %23 : vector<256x128xf32> to vector<256x128xbf16>
      %c0_17 = arith.constant 0 : index
      %c0_18 = arith.constant 0 : index
      %25 = vector.load %arg6[%c0_17, %c0_18] : memref<256x128xbf16, #tpu.memory_space<vmem>>, vector<256x128xbf16>
      tpu.vector_store %arg6[%c0_17, %c0_18], %24 {strides = array<i32>} : memref<256x128xbf16, #tpu.memory_space<vmem>>, vector<256x128xbf16>,
    } else {
    }
    return
  }
  func.func @transform_0(%arg0: i32, %arg1: i32, %arg2: i32) -> (i32, i32) {
    %c0_i32 = arith.constant 0 : i32
    return %arg0, %arg2 : i32, i32
  }
  func.func @transform_1(%arg0: i32, %arg1: i32, %arg2: i32) -> (i32, i32) {
    %c0_i32 = arith.constant 0 : i32
    return %arg2, %arg1 : i32, i32
  }
  func.func @transform_2(%arg0: i32, %arg1: i32, %arg2: i32) -> (i32, i32) {
    %c0_i32 = arith.constant 0 : i32
    %c0_i32_0 = arith.constant 0 : i32
    return %c0_i32, %arg1 : i32, i32
  }
  func.func @transform_3(%arg0: i32, %arg1: i32, %arg2: i32) -> (i32, i32) {
    %c0_i32 = arith.constant 0 : i32
    return %arg0, %arg1 : i32, i32
  }
}

</mosaic_0001>

<llo_original>
// kernel: pallas_matmul.1
$region0: #{pallas_matmul.1}
  #allocation0 [shape = 'u32[]', space=smem, size = 0x4, offset = 0x4, fixed_abs, tag = 'smem constant byte address 0x4 - core index']
  #allocation1 [shape = 'u32[72,128]{1,0:T(1,128)}', space=vmem, size = 0x9000, scoped, tag = 'internal scratch']
  #allocation2 [shape = 'f32[256,128]{1,0:T(8,128)}', space=vmem, size = 0x20000, scoped, tag = 'scratch operand']
  %s0 = inlined_call_operand.vmem [shape: bf16[2048,128], index: 0, kind: input, shape index: {}]
  %s1 = inlined_call_operand.vmem [shape: bf16[128,128], index: 1, kind: input, shape index: {}]
  %s2 = inlined_call_operand.vmem [shape: f32[1,128], index: 2, kind: input, shape index: {}]
  %s3 = inlined_call_operand.hbm [shape: bf16[2048,128], index: 3, kind: output, shape index: {}]
  %s4 = sld [smem:[#allocation0]]
  $region53: #{pallas_matmul.1} parent=0
    _
  %s6 = ssub.s32 1, %s4
  %s7 = scalar_select 0, %s6, %s4
  $region1: #{pallas_matmul.1} parent=0
    #allocation3 [shape = 'u8[131072]{0}', space=vmem, size = 0x20000, scoped, tag = 'output window, operand 0']
    #allocation4 [shape = 's32[2]{0}', space=sflag, size = 0x8, scoped, tag = 'scoped memory for pallas_matmul.1']
    %8 = vsyncpa [#allocation4], 0
    %s9 = scalar_lea.sflag [#allocation4], 1
    %10 = vsyncpa %s9, 0
    loop: start=0, step=1, limit=10
    $region2: #{pallas_matmul.1} parent=1 // loop_pre_header
      _
    $region3: #{pallas_matmul.1} parent=1 // loop_header
      %s12 = sphi 0, %s16
      %p13 = scmp.ge.s32.totalorder %s12, 10
      %s19 = sphi 0, %s38
      %s20 = sphi 0, %s34
      %s21 = sphi 0, %s30
      %s22 = sphi 0, %s19
      %s23 = sphi 0, %s20
      %s24 = sphi 0, %s21
      %s25 = sphi 0, %s22
      %s26 = sphi 0, %s23
      %s27 = sphi 0, %s24
      %s43 = sphi 0, %s45
      %s46 = sphi 0, %s43
      %s47 = sphi 0, %s46
      %s63 = sphi 0, %s47
      %s71 = sphi 0, %s73
      %s74 = sphi 0, %s71
      %s75 = sphi 0, %s74
      %s91 = sphi 0, %s75
      %s97 = sphi 0, %s99
      %s100 = sphi 0, %s97
      %s101 = sphi 0, %s100
      %s117 = sphi 0, %s101
      %s125 = sphi 0, %s127
      %s128 = sphi 0, %s125
      %s129 = sphi 0, %s128
      %s145 = sphi 0, %s129
    $region4: #{pallas_matmul.1} parent=1 // loop_header_branch
      %15 = sbr.rel (%p13) target = $region8
    $region5: #{pallas_matmul.1} parent=1 // loop_body
      %s17 = ssub.s32 %s12, 1
      %s18 = ssub.s32 %s12, 2
      %s28 = sadd.s32 1, %s21
      %p29 = scmp.ge.s32.totalorder %s28, 1
      %s30 = scalar_select %p29, 0, %s28
      %s31 = sadd.s32 1, %s20
      %s32 = scalar_select %p29, %s31, %s20
      %p33 = scmp.ge.s32.totalorder %s32, 1
      %s34 = scalar_select %p33, 0, %s32
      %s35 = sadd.s32 1, %s19
      %s36 = scalar_select %p33, %s35, %s19
      %p37 = scmp.ge.s32.totalorder %s36, 8
      %s38 = scalar_select %p37, 0, %s36
      %s39 = ssub.s32 %s19, %s38
      %s40 = ssub.s32 %s21, %s30
      %s41 = sor.u32 %s39, %s40
      %p42 = scmp.eq.s32.totalorder %s41, 0
      %s44 = sadd.s32 %s43, 1
      %s45 = scalar_select %p42, %s43, %s44
      %p48 = pneg %p42
      %p49 = scmp.eq.s32.totalorder %s12, 7
      %p50 = por %p48, %p49
      %p51 = scmp.ne.s32.totalorder %s43, %s46
      %p52 = scmp.eq.s32.totalorder %s12, 0
      %p53 = por %p51, %p52
      %p54 = scmp.ne.s32.totalorder %s43, %s46
      %p55 = scmp.eq.s32.totalorder %s17, 7
      %p56 = por %p54, %p55
      %p57 = scmp.ne.s32.totalorder %s46, %s47
      %p58 = scmp.eq.s32.totalorder %s17, 0
      %p59 = por %p57, %p58
      %p60 = scmp.ne.s32.totalorder %s46, %s47
      %p61 = scmp.eq.s32.totalorder %s18, 7
      %p62 = por %p60, %p61
      %p64 = scmp.ne.s32.totalorder %s47, %s63
      %p65 = scmp.eq.s32.totalorder %s18, 0
      %p66 = por %p64, %p65
      %s67 = ssub.s32 %s21, %s30
      %s68 = ssub.s32 %s20, %s34
      %s69 = sor.u32 %s67, %s68
      %p70 = scmp.eq.s32.totalorder %s69, 0
      %s72 = sadd.s32 %s71, 1
      %s73 = scalar_select %p70, %s71, %s72
      %p76 = pneg %p70
      %p77 = scmp.eq.s32.totalorder %s12, 7
      %p78 = por %p76, %p77
      %p79 = scmp.ne.s32.totalorder %s71, %s74
      %p80 = scmp.eq.s32.totalorder %s12, 0
      %p81 = por %p79, %p80
      %p82 = scmp.ne.s32.totalorder %s71, %s74
      %p83 = scmp.eq.s32.totalorder %s17, 7
      %p84 = por %p82, %p83
      %p85 = scmp.ne.s32.totalorder %s74, %s75
      %p86 = scmp.eq.s32.totalorder %s17, 0
      %p87 = por %p85, %p86
      %p88 = scmp.ne.s32.totalorder %s74, %s75
      %p89 = scmp.eq.s32.totalorder %s18, 7
      %p90 = por %p88, %p89
      %p92 = scmp.ne.s32.totalorder %s75, %s91
      %p93 = scmp.eq.s32.totalorder %s18, 0
      %p94 = por %p92, %p93
      %s95 = ssub.s32 %s20, %s34
      %p96 = scmp.eq.s32.totalorder %s95, 0
      %s98 = sadd.s32 %s97, 1
      %s99 = scalar_select %p96, %s97, %s98
      %p102 = pneg %p96
      %p103 = scmp.eq.s32.totalorder %s12, 7
      %p104 = por %p102, %p103
      %p105 = scmp.ne.s32.totalorder %s97, %s100
      %p106 = scmp.eq.s32.totalorder %s12, 0
      %p107 = por %p105, %p106
      %p108 = scmp.ne.s32.totalorder %s97, %s100
      %p109 = scmp.eq.s32.totalorder %s17, 7
      %p110 = por %p108, %p109
      %p111 = scmp.ne.s32.totalorder %s100, %s101
      %p112 = scmp.eq.s32.totalorder %s17, 0
      %p113 = por %p111, %p112
      %p114 = scmp.ne.s32.totalorder %s100, %s101
      %p115 = scmp.eq.s32.totalorder %s18, 7
      %p116 = por %p114, %p115
      %p118 = scmp.ne.s32.totalorder %s101, %s117
      %p119 = scmp.eq.s32.totalorder %s18, 0
      %p120 = por %p118, %p119
      %s121 = ssub.s32 %s19, %s38
      %s122 = ssub.s32 %s20, %s34
      %s123 = sor.u32 %s121, %s122
      %p124 = scmp.eq.s32.totalorder %s123, 0
      %s126 = sadd.s32 %s125, 1
      %s127 = scalar_select %p124, %s125, %s126
      %p130 = pneg %p124
      %p131 = scmp.eq.s32.totalorder %s12, 7
      %p132 = por %p130, %p131
      %p133 = scmp.ne.s32.totalorder %s125, %s128
      %p134 = scmp.eq.s32.totalorder %s12, 0
      %p135 = por %p133, %p134
      %p136 = scmp.ne.s32.totalorder %s125, %s128
      %p137 = scmp.eq.s32.totalorder %s17, 7
      %p138 = por %p136, %p137
      %p139 = scmp.ne.s32.totalorder %s128, %s129
      %p140 = scmp.eq.s32.totalorder %s17, 0
      %p141 = por %p139, %p140
      %p142 = scmp.ne.s32.totalorder %s128, %s129
      %p143 = scmp.eq.s32.totalorder %s18, 7
      %p144 = por %p142, %p143
      %p146 = scmp.ne.s32.totalorder %s129, %s145
      %p147 = scmp.eq.s32.totalorder %s18, 0
      %p148 = por %p146, %p147
      %p149 = scmp.le.s32.totalorder 1, %s12
      %p150 = scmp.lt.s32.totalorder %s12, 9
      %p151 = pnand %p149, %p150
      %p152 = pneg %p151
      // Predicated region
      $region9: #{pallas_matmul.1} parent=5 // pred_check
        _
      $region10: #{pallas_matmul.1} parent=5 // pred_check_branch
        %154 = sbr.rel (%p151) target = $region12
      $region11: #{pallas_matmul.1} parent=5 // pred_region
        %s155 = ssub.s32 %s12, 1
        // Predicated region
        $region13: #{pallas_matmul.1} parent=11 // pred_check
          %p156 = pneg %p87
        $region14: #{pallas_matmul.1} parent=11 // pred_check_branch
          %158 = sbr.rel (%p156) target = $region16
        $region15: #{pallas_matmul.1} parent=11 // pred_region
          %s159 = smul.u32 16, %s24
          %p160 = scmp.lt.s32.totalorder %s159, 15
          %s161 = scalar_select %p160, %s159, 15
          %p162 = scmp.lt.s32.totalorder %s23, 0
          %s163 = scalar_select %p162, %s23, 0
          %s164 = sadd.s32 %s163, %s161
          %s165 = smul.addr %s164, 4
          %s166 = scalar_lea.vmem %s1, %s165
          %s167 = smul.u32 16, %s24
        $region16: #{pallas_matmul.1} parent=11 // pred_fallthru
          _
        // Predicated region
        $region17: #{pallas_matmul.1} parent=11 // pred_check
          %p168 = pneg %p113
        $region18: #{pallas_matmul.1} parent=11 // pred_check_branch
          %170 = sbr.rel (%p168) target = $region20
        $region19: #{pallas_matmul.1} parent=11 // pred_region
          %p171 = scmp.lt.s32.totalorder %s23, 0
          %s172 = scalar_select %p171, %s23, 0
          %s173 = scalar_lea.vmem %s2, %s172
        $region20: #{pallas_matmul.1} parent=11 // pred_fallthru
          _
      $region12: #{pallas_matmul.1} parent=5 // pred_fallthru
        _
      %p174 = scmp.lt.s32.totalorder %s12, 8
      // Predicated region
      $region21: #{pallas_matmul.1} parent=5 // pred_check
        %p175 = pneg %p174
      $region22: #{pallas_matmul.1} parent=5 // pred_check_branch
        %177 = sbr.rel (%p175) target = $region24
      $region23: #{pallas_matmul.1} parent=5 // pred_region
        // Predicated region
        $region25: #{pallas_matmul.1} parent=23 // pred_check
          %p178 = pneg %p53
        $region26: #{pallas_matmul.1} parent=23 // pred_check_branch
          %180 = sbr.rel (%p178) target = $region28
        $region27: #{pallas_matmul.1} parent=23 // pred_region
          %s181 = smul.u32 32, %s19
          %p182 = scmp.lt.s32.totalorder %s181, 255
          %s183 = scalar_select %p182, %s181, 255
          %p184 = scmp.lt.s32.totalorder %s21, 0
          %s185 = scalar_select %p184, %s21, 0
          %s186 = sadd.s32 %s185, %s183
          %s187 = smul.addr %s186, 4
          %s188 = scalar_lea.vmem %s0, %s187
          %s189 = smul.u32 32, %s19
        $region28: #{pallas_matmul.1} parent=23 // pred_fallthru
          _
      $region24: #{pallas_matmul.1} parent=5 // pred_fallthru
        _
      %p190 = scmp.le.s32.totalorder 1, %s12
      %p191 = scmp.lt.s32.totalorder %s12, 9
      %p192 = pnand %p190, %p191
      %p193 = pneg %p192
      // Predicated region
      $region29: #{pallas_matmul.1} parent=5 // pred_check
        _
      $region30: #{pallas_matmul.1} parent=5 // pred_check_branch
        %195 = sbr.rel (%p192) target = $region32
      $region31: #{pallas_matmul.1} parent=5 // pred_region
        %s196 = ssub.s32 %s12, 1
        %s197 = smul.u32 32, %s22
        %p198 = scmp.lt.s32.totalorder %s197, 255
        %s199 = scalar_select %p198, %s197, 255
        %p200 = scmp.lt.s32.totalorder %s24, 0
        %s201 = scalar_select %p200, %s24, 0
        %s202 = sadd.s32 %s201, %s199
        %s203 = smul.addr %s202, 4
        %s204 = scalar_lea.vmem %s0, %s203
        %p205 = pneg %p59
        %p206 = pneg %p56
        %s207 = smul.u32 16, %s24
        %p208 = scmp.lt.s32.totalorder %s207, 15
        %s209 = scalar_select %p208, %s207, 15
        %p210 = scmp.lt.s32.totalorder %s23, 0
        %s211 = scalar_select %p210, %s23, 0
        %s212 = sadd.s32 %s211, %s209
        %s213 = smul.addr %s212, 4
        %s214 = scalar_lea.vmem %s1, %s213
        %p215 = pneg %p87
        %p216 = pneg %p84
        %p217 = scmp.lt.s32.totalorder %s23, 0
        %s218 = scalar_select %p217, %s23, 0
        %s219 = scalar_lea.vmem %s2, %s218
        %p220 = pneg %p113
        %p221 = pneg %p110
        %p222 = pneg %p141
        %p223 = pneg %p138
        %s224 = sand.u32 %s128, 1
        %s225 = scalar_lea.sflag [#allocation4], %s224
        %s226 = sand.u32 %s128, 1
        %s227 = smul.addr %s226, 128
        %s228 = scalar_lea.vmem [#allocation3], %s227
        %s229 = smul.u32 32, %s22
        %p230 = scmp.lt.s32.totalorder %s229, 255
        %s231 = scalar_select %p230, %s229, 255
        %p232 = scmp.lt.s32.totalorder %s24, 0
        %s233 = scalar_select %p232, %s24, 0
        %s234 = sadd.s32 %s233, %s231
        %s235 = smul.addr %s234, 4
        %s236 = scalar_lea.vmem %s0, %s235
        %s237 = smul.u32 32, %s22
        %s238 = smul.u32 16, %s24
        %p239 = scmp.lt.s32.totalorder %s238, 15
        %s240 = scalar_select %p239, %s238, 15
        %p241 = scmp.lt.s32.totalorder %s23, 0
        %s242 = scalar_select %p241, %s23, 0
        %s243 = sadd.s32 %s242, %s240
        %s244 = smul.addr %s243, 4
        %s245 = scalar_lea.vmem %s1, %s244
        %s246 = smul.u32 16, %s24
        %p247 = scmp.lt.s32.totalorder %s23, 0
        %s248 = scalar_select %p247, %s23, 0
        %s249 = scalar_lea.vmem %s2, %s248
        %s250 = smul.u32 32, %s22
        %p251 = scmp.eq.s32.totalorder %s24, 0
        // Predicated region
        $region33: #{pallas_matmul.1} parent=31 // pred_check
          %p252 = pneg %p251
        $region34: #{pallas_matmul.1} parent=31 // pred_check_branch
          %254 = sbr.rel (%p252) target = $region36
        $region35: #{pallas_matmul.1} parent=31 // pred_region
          %255 = vst [vmem:[#allocation2] sm:$0xff] 0.0
          %256 = vst [vmem:[#allocation2 + $0x8] sm:$0xff] 0.0
          %257 = vst [vmem:[#allocation2 + $0x10] sm:$0xff] 0.0
          %258 = vst [vmem:[#allocation2 + $0x18] sm:$0xff] 0.0
          %259 = vst [vmem:[#allocation2 + $0x20] sm:$0xff] 0.0
          %260 = vst [vmem:[#allocation2 + $0x28] sm:$0xff] 0.0
          %261 = vst [vmem:[#allocation2 + $0x30] sm:$0xff] 0.0
          %262 = vst [vmem:[#allocation2 + $0x38] sm:$0xff] 0.0
          %263 = vst [vmem:[#allocation2 + $0x40] sm:$0xff] 0.0
          %264 = vst [vmem:[#allocation2 + $0x48] sm:$0xff] 0.0
          %265 = vst [vmem:[#allocation2 + $0x50] sm:$0xff] 0.0
          %266 = vst [vmem:[#allocation2 + $0x58] sm:$0xff] 0.0
          %267 = vst [vmem:[#allocation2 + $0x60] sm:$0xff] 0.0
          %268 = vst [vmem:[#allocation2 + $0x68] sm:$0xff] 0.0
          %269 = vst [vmem:[#allocation2 + $0x70] sm:$0xff] 0.0
          %270 = vst [vmem:[#allocation2 + $0x78] sm:$0xff] 0.0
          %271 = vst [vmem:[#allocation2 + $0x80] sm:$0xff] 0.0
          %272 = vst [vmem:[#allocation2 + $0x88] sm:$0xff] 0.0
          %273 = vst [vmem:[#allocation2 + $0x90] sm:$0xff] 0.0
          %274 = vst [vmem:[#allocation2 + $0x98] sm:$0xff] 0.0
          %275 = vst [vmem:[#allocation2 + $0xa0] sm:$0xff] 0.0
          %276 = vst [vmem:[#allocation2 + $0xa8] sm:$0xff] 0.0
          %277 = vst [vmem:[#allocation2 + $0xb0] sm:$0xff] 0.0
          %278 = vst [vmem:[#allocation2 + $0xb8] sm:$0xff] 0.0
          %279 = vst [vmem:[#allocation2 + $0xc0] sm:$0xff] 0.0
          %280 = vst [vmem:[#allocation2 + $0xc8] sm:$0xff] 0.0
          %281 = vst [vmem:[#allocation2 + $0xd0] sm:$0xff] 0.0
          %282 = vst [vmem:[#allocation2 + $0xd8] sm:$0xff] 0.0
          %283 = vst [vmem:[#allocation2 + $0xe0] sm:$0xff] 0.0
          %284 = vst [vmem:[#allocation2 + $0xe8] sm:$0xff] 0.0
          %285 = vst [vmem:[#allocation2 + $0xf0] sm:$0xff] 0.0
          %286 = vst [vmem:[#allocation2 + $0xf8] sm:$0xff] 0.0
        $region36: #{pallas_matmul.1} parent=31 // pred_fallthru
          _
        %v287 = vld [vmem:[#allocation2] sm:$0xff]
        %v288 = vld [vmem:[#allocation2 + $0x8] sm:$0xff]
        %v289 = vld [vmem:[#allocation2 + $0x10] sm:$0xff]
        %v290 = vld [vmem:[#allocation2 + $0x18] sm:$0xff]
        %v291 = vld [vmem:[#allocation2 + $0x20] sm:$0xff]
        %v292 = vld [vmem:[#allocation2 + $0x28] sm:$0xff]
        %v293 = vld [vmem:[#allocation2 + $0x30] sm:$0xff]
        %v294 = vld [vmem:[#allocation2 + $0x38] sm:$0xff]
        %v295 = vld [vmem:[#allocation2 + $0x40] sm:$0xff]
        %v296 = vld [vmem:[#allocation2 + $0x48] sm:$0xff]
        %v297 = vld [vmem:[#allocation2 + $0x50] sm:$0xff]
        %v298 = vld [vmem:[#allocation2 + $0x58] sm:$0xff]
        %v299 = vld [vmem:[#allocation2 + $0x60] sm:$0xff]
        %v300 = vld [vmem:[#allocation2 + $0x68] sm:$0xff]
        %v301 = vld [vmem:[#allocation2 + $0x70] sm:$0xff]
        %v302 = vld [vmem:[#allocation2 + $0x78] sm:$0xff]
        %v303 = vld [vmem:[#allocation2 + $0x80] sm:$0xff]
        %v304 = vld [vmem:[#allocation2 + $0x88] sm:$0xff]
        %v305 = vld [vmem:[#allocation2 + $0x90] sm:$0xff]
        %v306 = vld [vmem:[#allocation2 + $0x98] sm:$0xff]
        %v307 = vld [vmem:[#allocation2 + $0xa0] sm:$0xff]
        %v308 = vld [vmem:[#allocation2 + $0xa8] sm:$0xff]
        %v309 = vld [vmem:[#allocation2 + $0xb0] sm:$0xff]
        %v310 = vld [vmem:[#allocation2 + $0xb8] sm:$0xff]
        %v311 = vld [vmem:[#allocation2 + $0xc0] sm:$0xff]
        %v312 = vld [vmem:[#allocation2 + $0xc8] sm:$0xff]
        %v313 = vld [vmem:[#allocation2 + $0xd0] sm:$0xff]
        %v314 = vld [vmem:[#allocation2 + $0xd8] sm:$0xff]
        %v315 = vld [vmem:[#allocation2 + $0xe0] sm:$0xff]
        %v316 = vld [vmem:[#allocation2 + $0xe8] sm:$0xff]
        %v317 = vld [vmem:[#allocation2 + $0xf0] sm:$0xff]
        %v318 = vld [vmem:[#allocation2 + $0xf8] sm:$0xff]
        %v319 = vld [vmem:[%s236] sm:$0xf]
        %v320 = vld [vmem:[%s236 + $0x4] sm:$0xf]
        %v321 = vld [vmem:[%s236 + $0x8] sm:$0xf]
        %v322 = vld [vmem:[%s236 + $0xc] sm:$0xf]
        %v323 = vld [vmem:[%s236 + $0x10] sm:$0xf]
        %v324 = vld [vmem:[%s236 + $0x14] sm:$0xf]
        %v325 = vld [vmem:[%s236 + $0x18] sm:$0xf]
        %v326 = vld [vmem:[%s236 + $0x1c] sm:$0xf]
        %v327 = vld [vmem:[%s236 + $0x20] sm:$0xf]
        %v328 = vld [vmem:[%s236 + $0x24] sm:$0xf]
        %v329 = vld [vmem:[%s236 + $0x28] sm:$0xf]
        %v330 = vld [vmem:[%s236 + $0x2c] sm:$0xf]
        %v331 = vld [vmem:[%s236 + $0x30] sm:$0xf]
        %v332 = vld [vmem:[%s236 + $0x34] sm:$0xf]
        %v333 = vld [vmem:[%s236 + $0x38] sm:$0xf]
        %v334 = vld [vmem:[%s236 + $0x3c] sm:$0xf]
        %v335 = vld [vmem:[%s236 + $0x40] sm:$0xf]
        %v336 = vld [vmem:[%s236 + $0x44] sm:$0xf]
        %v337 = vld [vmem:[%s236 + $0x48] sm:$0xf]
        %v338 = vld [vmem:[%s236 + $0x4c] sm:$0xf]
        %v339 = vld [vmem:[%s236 + $0x50] sm:$0xf]
        %v340 = vld [vmem:[%s236 + $0x54] sm:$0xf]
        %v341 = vld [vmem:[%s236 + $0x58] sm:$0xf]
        %v342 = vld [vmem:[%s236 + $0x5c] sm:$0xf]
        %v343 = vld [vmem:[%s236 + $0x60] sm:$0xf]
        %v344 = vld [vmem:[%s236 + $0x64] sm:$0xf]
        %v345 = vld [vmem:[%s236 + $0x68] sm:$0xf]
        %v346 = vld [vmem:[%s236 + $0x6c] sm:$0xf]
        %v347 = vld [vmem:[%s236 + $0x70] sm:$0xf]
        %v348 = vld [vmem:[%s236 + $0x74] sm:$0xf]
        %v349 = vld [vmem:[%s236 + $0x78] sm:$0xf]
        %v350 = vld [vmem:[%s236 + $0x7c] sm:$0xf]
        %v351 = vld [vmem:[%s245] sm:$0xf]
        %v352 = vld [vmem:[%s245 + $0x4] sm:$0xf]
        %v353 = vld [vmem:[%s245 + $0x8] sm:$0xf]
        %v354 = vld [vmem:[%s245 + $0xc] sm:$0xf]
        %v355 = vld [vmem:[%s245 + $0x10] sm:$0xf]
        %v356 = vld [vmem:[%s245 + $0x14] sm:$0xf]
        %v357 = vld [vmem:[%s245 + $0x18] sm:$0xf]
        %v358 = vld [vmem:[%s245 + $0x1c] sm:$0xf]
        %v359 = vld [vmem:[%s245 + $0x20] sm:$0xf]
        %v360 = vld [vmem:[%s245 + $0x24] sm:$0xf]
        %v361 = vld [vmem:[%s245 + $0x28] sm:$0xf]
        %v362 = vld [vmem:[%s245 + $0x2c] sm:$0xf]
        %v363 = vld [vmem:[%s245 + $0x30] sm:$0xf]
        %v364 = vld [vmem:[%s245 + $0x34] sm:$0xf]
        %v365 = vld [vmem:[%s245 + $0x38] sm:$0xf]
        %v366 = vld [vmem:[%s245 + $0x3c] sm:$0xf]
        %v399 = vunpack.c.l.b16 %v319
        %v400 = vunpack.c.l.b16 %v320
        %v401 = vunpack.c.l.b16 %v321
        %v402 = vunpack.c.l.b16 %v322
        %v403 = vunpack.c.l.b16 %v323
        %v404 = vunpack.c.l.b16 %v324
        %v405 = vunpack.c.l.b16 %v325
        %v406 = vunpack.c.l.b16 %v326
        %v407 = vunpack.c.l.b16 %v327
        %v408 = vunpack.c.l.b16 %v328
        %v409 = vunpack.c.l.b16 %v329
        %v410 = vunpack.c.l.b16 %v330
        %v411 = vunpack.c.l.b16 %v331
        %v412 = vunpack.c.l.b16 %v332
        %v413 = vunpack.c.l.b16 %v333
        %v414 = vunpack.c.l.b16 %v334
        %v415 = vunpack.c.l.b16 %v335
        %v416 = vunpack.c.l.b16 %v336
        %v417 = vunpack.c.l.b16 %v337
        %v418 = vunpack.c.l.b16 %v338
        %v419 = vunpack.c.l.b16 %v339
        %v420 = vunpack.c.l.b16 %v340
        %v421 = vunpack.c.l.b16 %v341
        %v422 = vunpack.c.l.b16 %v342
        %v423 = vunpack.c.l.b16 %v343
        %v424 = vunpack.c.l.b16 %v344
        %v425 = vunpack.c.l.b16 %v345
        %v426 = vunpack.c.l.b16 %v346
        %v427 = vunpack.c.l.b16 %v347
        %v428 = vunpack.c.l.b16 %v348
        %v429 = vunpack.c.l.b16 %v349
        %v430 = vunpack.c.l.b16 %v350
        %v431 = vpack.c.b16 %v400, %v399
        %v432 = vpack.c.b16 %v402, %v401
        %v433 = vpack.c.b16 %v404, %v403
        %v434 = vpack.c.b16 %v406, %v405
        %v435 = vpack.c.b16 %v408, %v407
        %v436 = vpack.c.b16 %v410, %v409
        %v437 = vpack.c.b16 %v412, %v411
        %v438 = vpack.c.b16 %v414, %v413
        %v439 = vpack.c.b16 %v416, %v415
        %v440 = vpack.c.b16 %v418, %v417
        %v441 = vpack.c.b16 %v420, %v419
        %v442 = vpack.c.b16 %v422, %v421
        %v443 = vpack.c.b16 %v424, %v423
        %v444 = vpack.c.b16 %v426, %v425
        %v445 = vpack.c.b16 %v428, %v427
        %v446 = vpack.c.b16 %v430, %v429
        %v479 = vunpack.c.l.b16 %v351
        %v480 = vunpack.c.l.b16 %v352
        %v481 = vunpack.c.l.b16 %v353
        %v482 = vunpack.c.l.b16 %v354
        %v483 = vunpack.c.l.b16 %v355
        %v484 = vunpack.c.l.b16 %v356
        %v485 = vunpack.c.l.b16 %v357
        %v486 = vunpack.c.l.b16 %v358
        %v487 = vunpack.c.l.b16 %v359
        %v488 = vunpack.c.l.b16 %v360
        %v489 = vunpack.c.l.b16 %v361
        %v490 = vunpack.c.l.b16 %v362
        %v491 = vunpack.c.l.b16 %v363
        %v492 = vunpack.c.l.b16 %v364
        %v493 = vunpack.c.l.b16 %v365
        %v494 = vunpack.c.l.b16 %v366
        %v495 = vpack.c.b16 %v480, %v479
        %v496 = vpack.c.b16 %v482, %v481
        %v497 = vpack.c.b16 %v484, %v483
        %v498 = vpack.c.b16 %v486, %v485
        %v499 = vpack.c.b16 %v488, %v487
        %v500 = vpack.c.b16 %v490, %v489
        %v501 = vpack.c.b16 %v492, %v491
        %v502 = vpack.c.b16 %v494, %v493
        %511 = vmatpush.bf16.msra.mxu0 %v502
        %512 = vmatpush.bf16.msra.mxu0 %v501
        %513 = vmatpush.bf16.msra.mxu0 %v500
        %514 = vmatpush.bf16.msra.mxu0 %v499
        %515 = vmatpush.bf16.msra.mxu0 %v498
        %516 = vmatpush.bf16.msra.mxu0 %v497
        %517 = vmatpush.bf16.msra.mxu0 %v496
        %518 = vmatpush.bf16.msra.mxu0 %v495
        %519 = vmatmul.bf16.gmra.mxu0 %v431
        %v520 = vpop.f32.mrf.mxu0
        %v521 = vadd.f32 0.0, %v520
        %v522 = vpop.f32.mrf.mxu0
        %v523 = vadd.f32 0.0, %v522
        %524 = vmatmul.bf16.gmra.mxu0 %v432
        %v525 = vpop.f32.mrf.mxu0
        %v526 = vadd.f32 0.0, %v525
        %v527 = vpop.f32.mrf.mxu0
        %v528 = vadd.f32 0.0, %v527
        %529 = vmatmul.bf16.gmra.mxu0 %v433
        %v530 = vpop.f32.mrf.mxu0
        %v531 = vadd.f32 0.0, %v530
        %v532 = vpop.f32.mrf.mxu0
        %v533 = vadd.f32 0.0, %v532
        %534 = vmatmul.bf16.gmra.mxu0 %v434
        %v535 = vpop.f32.mrf.mxu0
        %v536 = vadd.f32 0.0, %v535
        %v537 = vpop.f32.mrf.mxu0
        %v538 = vadd.f32 0.0, %v537
        %539 = vmatmul.bf16.gmra.mxu0 %v435
        %v540 = vpop.f32.mrf.mxu0
        %v541 = vadd.f32 0.0, %v540
        %v542 = vpop.f32.mrf.mxu0
        %v543 = vadd.f32 0.0, %v542
        %544 = vmatmul.bf16.gmra.mxu0 %v436
        %v545 = vpop.f32.mrf.mxu0
        %v546 = vadd.f32 0.0, %v545
        %v547 = vpop.f32.mrf.mxu0
        %v548 = vadd.f32 0.0, %v547
        %549 = vmatmul.bf16.gmra.mxu0 %v437
        %v550 = vpop.f32.mrf.mxu0
        %v551 = vadd.f32 0.0, %v550
        %v552 = vpop.f32.mrf.mxu0
        %v553 = vadd.f32 0.0, %v552
        %554 = vmatmul.bf16.gmra.mxu0 %v438
        %v555 = vpop.f32.mrf.mxu0
        %v556 = vadd.f32 0.0, %v555
        %v557 = vpop.f32.mrf.mxu0
        %v558 = vadd.f32 0.0, %v557
        %559 = vmatmul.bf16.gmra.mxu0 %v439
        %v560 = vpop.f32.mrf.mxu0
        %v561 = vadd.f32 0.0, %v560
        %v562 = vpop.f32.mrf.mxu0
        %v563 = vadd.f32 0.0, %v562
        %564 = vmatmul.bf16.gmra.mxu0 %v440
        %v565 = vpop.f32.mrf.mxu0
        %v566 = vadd.f32 0.0, %v565
        %v567 = vpop.f32.mrf.mxu0
        %v568 = vadd.f32 0.0, %v567
        %569 = vmatmul.bf16.gmra.mxu0 %v441
        %v570 = vpop.f32.mrf.mxu0
        %v571 = vadd.f32 0.0, %v570
        %v572 = vpop.f32.mrf.mxu0
        %v573 = vadd.f32 0.0, %v572
        %574 = vmatmul.bf16.gmra.mxu0 %v442
        %v575 = vpop.f32.mrf.mxu0
        %v576 = vadd.f32 0.0, %v575
        %v577 = vpop.f32.mrf.mxu0
        %v578 = vadd.f32 0.0, %v577
        %579 = vmatmul.bf16.gmra.mxu0 %v443
        %v580 = vpop.f32.mrf.mxu0
        %v581 = vadd.f32 0.0, %v580
        %v582 = vpop.f32.mrf.mxu0
        %v583 = vadd.f32 0.0, %v582
        %584 = vmatmul.bf16.gmra.mxu0 %v444
        %v585 = vpop.f32.mrf.mxu0
        %v586 = vadd.f32 0.0, %v585
        %v587 = vpop.f32.mrf.mxu0
        %v588 = vadd.f32 0.0, %v587
        %589 = vmatmul.bf16.gmra.mxu0 %v445
        %v590 = vpop.f32.mrf.mxu0
        %v591 = vadd.f32 0.0, %v590
        %v592 = vpop.f32.mrf.mxu0
        %v593 = vadd.f32 0.0, %v592
        %594 = vmatmul.bf16.gmra.mxu0 %v446
        %v595 = vpop.f32.mrf.mxu0
        %v596 = vadd.f32 0.0, %v595
        %v597 = vpop.f32.mrf.mxu0
        %v598 = vadd.f32 0.0, %v597
        %599 = vdwg.mxu0
        %v600 = vadd.f32 %v287, %v521
        %v601 = vadd.f32 %v288, %v523
        %v602 = vadd.f32 %v289, %v526
        %v603 = vadd.f32 %v290, %v528
        %v604 = vadd.f32 %v291, %v531
        %v605 = vadd.f32 %v292, %v533
        %v606 = vadd.f32 %v293, %v536
        %v607 = vadd.f32 %v294, %v538
        %v608 = vadd.f32 %v295, %v541
        %v609 = vadd.f32 %v296, %v543
        %v610 = vadd.f32 %v297, %v546
        %v611 = vadd.f32 %v298, %v548
        %v612 = vadd.f32 %v299, %v551
        %v613 = vadd.f32 %v300, %v553
        %v614 = vadd.f32 %v301, %v556
        %v615 = vadd.f32 %v302, %v558
        %v616 = vadd.f32 %v303, %v561
        %v617 = vadd.f32 %v304, %v563
        %v618 = vadd.f32 %v305, %v566
        %v619 = vadd.f32 %v306, %v568
        %v620 = vadd.f32 %v307, %v571
        %v621 = vadd.f32 %v308, %v573
        %v622 = vadd.f32 %v309, %v576
        %v623 = vadd.f32 %v310, %v578
        %v624 = vadd.f32 %v311, %v581
        %v625 = vadd.f32 %v312, %v583
        %v626 = vadd.f32 %v313, %v586
        %v627 = vadd.f32 %v314, %v588
        %v628 = vadd.f32 %v315, %v591
        %v629 = vadd.f32 %v316, %v593
        %v630 = vadd.f32 %v317, %v596
        %v631 = vadd.f32 %v318, %v598
        %632 = vst [vmem:[#allocation2] sm:$0xff] %v600
        %633 = vst [vmem:[#allocation2 + $0x8] sm:$0xff] %v601
        %634 = vst [vmem:[#allocation2 + $0x10] sm:$0xff] %v602
        %635 = vst [vmem:[#allocation2 + $0x18] sm:$0xff] %v603
        %636 = vst [vmem:[#allocation2 + $0x20] sm:$0xff] %v604
        %637 = vst [vmem:[#allocation2 + $0x28] sm:$0xff] %v605
        %638 = vst [vmem:[#allocation2 + $0x30] sm:$0xff] %v606
        %639 = vst [vmem:[#allocation2 + $0x38] sm:$0xff] %v607
        %640 = vst [vmem:[#allocation2 + $0x40] sm:$0xff] %v608
        %641 = vst [vmem:[#allocation2 + $0x48] sm:$0xff] %v609
        %642 = vst [vmem:[#allocation2 + $0x50] sm:$0xff] %v610
        %643 = vst [vmem:[#allocation2 + $0x58] sm:$0xff] %v611
        %644 = vst [vmem:[#allocation2 + $0x60] sm:$0xff] %v612
        %645 = vst [vmem:[#allocation2 + $0x68] sm:$0xff] %v613
        %646 = vst [vmem:[#allocation2 + $0x70] sm:$0xff] %v614
        %647 = vst [vmem:[#allocation2 + $0x78] sm:$0xff] %v615
        %648 = vst [vmem:[#allocation2 + $0x80] sm:$0xff] %v616
        %649 = vst [vmem:[#allocation2 + $0x88] sm:$0xff] %v617
        %650 = vst [vmem:[#allocation2 + $0x90] sm:$0xff] %v618
        %651 = vst [vmem:[#allocation2 + $0x98] sm:$0xff] %v619
        %652 = vst [vmem:[#allocation2 + $0xa0] sm:$0xff] %v620
        %653 = vst [vmem:[#allocation2 + $0xa8] sm:$0xff] %v621
        %654 = vst [vmem:[#allocation2 + $0xb0] sm:$0xff] %v622
        %655 = vst [vmem:[#allocation2 + $0xb8] sm:$0xff] %v623
        %656 = vst [vmem:[#allocation2 + $0xc0] sm:$0xff] %v624
        %657 = vst [vmem:[#allocation2 + $0xc8] sm:$0xff] %v625
        %658 = vst [vmem:[#allocation2 + $0xd0] sm:$0xff] %v626
        %659 = vst [vmem:[#allocation2 + $0xd8] sm:$0xff] %v627
        %660 = vst [vmem:[#allocation2 + $0xe0] sm:$0xff] %v628
        %661 = vst [vmem:[#allocation2 + $0xe8] sm:$0xff] %v629
        %662 = vst [vmem:[#allocation2 + $0xf0] sm:$0xff] %v630
        %663 = vst [vmem:[#allocation2 + $0xf8] sm:$0xff] %v631
        // Predicated region
        $region37: #{pallas_matmul.1} parent=31 // pred_check
          %p664 = pneg %p251
        $region38: #{pallas_matmul.1} parent=31 // pred_check_branch
          %666 = sbr.rel (%p664) target = $region40
        $region39: #{pallas_matmul.1} parent=31 // pred_region
          %v667 = vld [vmem:[#allocation2] sm:$0xff]
          %v668 = vld [vmem:[#allocation2 + $0x8] sm:$0xff]
          %v669 = vld [vmem:[#allocation2 + $0x10] sm:$0xff]
          %v670 = vld [vmem:[#allocation2 + $0x18] sm:$0xff]
          %v671 = vld [vmem:[#allocation2 + $0x20] sm:$0xff]
          %v672 = vld [vmem:[#allocation2 + $0x28] sm:$0xff]
          %v673 = vld [vmem:[#allocation2 + $0x30] sm:$0xff]
          %v674 = vld [vmem:[#allocation2 + $0x38] sm:$0xff]
          %v675 = vld [vmem:[#allocation2 + $0x40] sm:$0xff]
          %v676 = vld [vmem:[#allocation2 + $0x48] sm:$0xff]
          %v677 = vld [vmem:[#allocation2 + $0x50] sm:$0xff]
          %v678 = vld [vmem:[#allocation2 + $0x58] sm:$0xff]
          %v679 = vld [vmem:[#allocation2 + $0x60] sm:$0xff]
          %v680 = vld [vmem:[#allocation2 + $0x68] sm:$0xff]
          %v681 = vld [vmem:[#allocation2 + $0x70] sm:$0xff]
          %v682 = vld [vmem:[#allocation2 + $0x78] sm:$0xff]
          %v683 = vld [vmem:[#allocation2 + $0x80] sm:$0xff]
          %v684 = vld [vmem:[#allocation2 + $0x88] sm:$0xff]
          %v685 = vld [vmem:[#allocation2 + $0x90] sm:$0xff]
          %v686 = vld [vmem:[#allocation2 + $0x98] sm:$0xff]
          %v687 = vld [vmem:[#allocation2 + $0xa0] sm:$0xff]
          %v688 = vld [vmem:[#allocation2 + $0xa8] sm:$0xff]
          %v689 = vld [vmem:[#allocation2 + $0xb0] sm:$0xff]
          %v690 = vld [vmem:[#allocation2 + $0xb8] sm:$0xff]
          %v691 = vld [vmem:[#allocation2 + $0xc0] sm:$0xff]
          %v692 = vld [vmem:[#allocation2 + $0xc8] sm:$0xff]
          %v693 = vld [vmem:[#allocation2 + $0xd0] sm:$0xff]
          %v694 = vld [vmem:[#allocation2 + $0xd8] sm:$0xff]
          %v695 = vld [vmem:[#allocation2 + $0xe0] sm:$0xff]
          %v696 = vld [vmem:[#allocation2 + $0xe8] sm:$0xff]
          %v697 = vld [vmem:[#allocation2 + $0xf0] sm:$0xff]
          %v698 = vld [vmem:[#allocation2 + $0xf8] sm:$0xff]
          %v699 = vld [vmem:[%s249] sm:$0x1]
          %v701 = vperm.slane %v699, 0
          %v703 = vadd.f32 %v667, %v701
          %v704 = vadd.f32 %v668, %v701
          %v705 = vadd.f32 %v669, %v701
          %v706 = vadd.f32 %v670, %v701
          %v707 = vadd.f32 %v671, %v701
          %v708 = vadd.f32 %v672, %v701
          %v709 = vadd.f32 %v673, %v701
          %v710 = vadd.f32 %v674, %v701
          %v711 = vadd.f32 %v675, %v701
          %v712 = vadd.f32 %v676, %v701
          %v713 = vadd.f32 %v677, %v701
          %v714 = vadd.f32 %v678, %v701
          %v715 = vadd.f32 %v679, %v701
          %v716 = vadd.f32 %v680, %v701
          %v717 = vadd.f32 %v681, %v701
          %v718 = vadd.f32 %v682, %v701
          %v719 = vadd.f32 %v683, %v701
          %v720 = vadd.f32 %v684, %v701
          %v721 = vadd.f32 %v685, %v701
          %v722 = vadd.f32 %v686, %v701
          %v723 = vadd.f32 %v687, %v701
          %v724 = vadd.f32 %v688, %v701
          %v725 = vadd.f32 %v689, %v701
          %v726 = vadd.f32 %v690, %v701
          %v727 = vadd.f32 %v691, %v701
          %v728 = vadd.f32 %v692, %v701
          %v729 = vadd.f32 %v693, %v701
          %v730 = vadd.f32 %v694, %v701
          %v731 = vadd.f32 %v695, %v701
          %v732 = vadd.f32 %v696, %v701
          %v733 = vadd.f32 %v697, %v701
          %v734 = vadd.f32 %v698, %v701
          %v735 = vsub.f32 0.0, %v703
          %v736 = vsub.f32 0.0, %v704
          %v737 = vsub.f32 0.0, %v705
          %v738 = vsub.f32 0.0, %v706
          %v739 = vsub.f32 0.0, %v707
          %v740 = vsub.f32 0.0, %v708
          %v741 = vsub.f32 0.0, %v709
          %v742 = vsub.f32 0.0, %v710
          %v743 = vsub.f32 0.0, %v711
          %v744 = vsub.f32 0.0, %v712
          %v745 = vsub.f32 0.0, %v713
          %v746 = vsub.f32 0.0, %v714
          %v747 = vsub.f32 0.0, %v715
          %v748 = vsub.f32 0.0, %v716
          %v749 = vsub.f32 0.0, %v717
          %v750 = vsub.f32 0.0, %v718
          %v751 = vsub.f32 0.0, %v719
          %v752 = vsub.f32 0.0, %v720
          %v753 = vsub.f32 0.0, %v721
          %v754 = vsub.f32 0.0, %v722
          %v755 = vsub.f32 0.0, %v723
          %v756 = vsub.f32 0.0, %v724
          %v757 = vsub.f32 0.0, %v725
          %v758 = vsub.f32 0.0, %v726
          %v759 = vsub.f32 0.0, %v727
          %v760 = vsub.f32 0.0, %v728
          %v761 = vsub.f32 0.0, %v729
          %v762 = vsub.f32 0.0, %v730
          %v763 = vsub.f32 0.0, %v731
          %v764 = vsub.f32 0.0, %v732
          %v765 = vsub.f32 0.0, %v733
          %v766 = vsub.f32 0.0, %v734
          %v767 = vmul.f32 %v735, 1.442695
          %v768 = vpow.pop %v767
          %v769 = vmul.f32 %v736, 1.442695
          %v770 = vpow.pop %v769
          %v771 = vmul.f32 %v737, 1.442695
          %v772 = vpow.pop %v771
          %v773 = vmul.f32 %v738, 1.442695
          %v774 = vpow.pop %v773
          %v775 = vmul.f32 %v739, 1.442695
          %v776 = vpow.pop %v775
          %v777 = vmul.f32 %v740, 1.442695
          %v778 = vpow.pop %v777
          %v779 = vmul.f32 %v741, 1.442695
          %v780 = vpow.pop %v779
          %v781 = vmul.f32 %v742, 1.442695
          %v782 = vpow.pop %v781
          %v783 = vmul.f32 %v743, 1.442695
          %v784 = vpow.pop %v783
          %v785 = vmul.f32 %v744, 1.442695
          %v786 = vpow.pop %v785
          %v787 = vmul.f32 %v745, 1.442695
          %v788 = vpow.pop %v787
          %v789 = vmul.f32 %v746, 1.442695
          %v790 = vpow.pop %v789
          %v791 = vmul.f32 %v747, 1.442695
          %v792 = vpow.pop %v791
          %v793 = vmul.f32 %v748, 1.442695
          %v794 = vpow.pop %v793
          %v795 = vmul.f32 %v749, 1.442695
          %v796 = vpow.pop %v795
          %v797 = vmul.f32 %v750, 1.442695
          %v798 = vpow.pop %v797
          %v799 = vmul.f32 %v751, 1.442695
          %v800 = vpow.pop %v799
          %v801 = vmul.f32 %v752, 1.442695
          %v802 = vpow.pop %v801
          %v803 = vmul.f32 %v753, 1.442695
          %v804 = vpow.pop %v803
          %v805 = vmul.f32 %v754, 1.442695
          %v806 = vpow.pop %v805
          %v807 = vmul.f32 %v755, 1.442695
          %v808 = vpow.pop %v807
          %v809 = vmul.f32 %v756, 1.442695
          %v810 = vpow.pop %v809
          %v811 = vmul.f32 %v757, 1.442695
          %v812 = vpow.pop %v811
          %v813 = vmul.f32 %v758, 1.442695
          %v814 = vpow.pop %v813
          %v815 = vmul.f32 %v759, 1.442695
          %v816 = vpow.pop %v815
          %v817 = vmul.f32 %v760, 1.442695
          %v818 = vpow.pop %v817
          %v819 = vmul.f32 %v761, 1.442695
          %v820 = vpow.pop %v819
          %v821 = vmul.f32 %v762, 1.442695
          %v822 = vpow.pop %v821
          %v823 = vmul.f32 %v763, 1.442695
          %v824 = vpow.pop %v823
          %v825 = vmul.f32 %v764, 1.442695
          %v826 = vpow.pop %v825
          %v827 = vmul.f32 %v765, 1.442695
          %v828 = vpow.pop %v827
          %v829 = vmul.f32 %v766, 1.442695
          %v830 = vpow.pop %v829
          %v831 = vadd.f32 %v768, 1.0
          %v832 = vadd.f32 %v770, 1.0
          %v833 = vadd.f32 %v772, 1.0
          %v834 = vadd.f32 %v774, 1.0
          %v835 = vadd.f32 %v776, 1.0
          %v836 = vadd.f32 %v778, 1.0
          %v837 = vadd.f32 %v780, 1.0
          %v838 = vadd.f32 %v782, 1.0
          %v839 = vadd.f32 %v784, 1.0
          %v840 = vadd.f32 %v786, 1.0
          %v841 = vadd.f32 %v788, 1.0
          %v842 = vadd.f32 %v790, 1.0
          %v843 = vadd.f32 %v792, 1.0
          %v844 = vadd.f32 %v794, 1.0
          %v845 = vadd.f32 %v796, 1.0
          %v846 = vadd.f32 %v798, 1.0
          %v847 = vadd.f32 %v800, 1.0
          %v848 = vadd.f32 %v802, 1.0
          %v849 = vadd.f32 %v804, 1.0
          %v850 = vadd.f32 %v806, 1.0
          %v851 = vadd.f32 %v808, 1.0
          %v852 = vadd.f32 %v810, 1.0
          %v853 = vadd.f32 %v812, 1.0
          %v854 = vadd.f32 %v814, 1.0
          %v855 = vadd.f32 %v816, 1.0
          %v856 = vadd.f32 %v818, 1.0
          %v857 = vadd.f32 %v820, 1.0
          %v858 = vadd.f32 %v822, 1.0
          %v859 = vadd.f32 %v824, 1.0
          %v860 = vadd.f32 %v826, 1.0
          %v861 = vadd.f32 %v828, 1.0
          %v862 = vadd.f32 %v830, 1.0
          %v863 = vrcp.pop %v831
          %v864 = vmul.f32 %v831, %v863
          %v865 = vsub.f32 1.0, %v864
          %v866 = vmul.f32 %v863, %v865
          %v867 = vadd.f32 %v863, %v866
          %vm868 = vweird.f32 %v831
          %vm869 = vweird.f32 %v863
          %vm870 = vmor %vm868, %vm869
          %v871 = vsel %vm870, %v863, %v867
          %v872 = vand.u32 2147483647, %v831
          %vm873 = vcmp.eq.f32.partialorder %v872, 8.507059e+37
          %v874 = vand.u32 %v831, 2147483648
          %v875 = vor.u32 1.1754944e-38, %v874
          %v876 = vsel %vm873, %v875, %v871
          %v877 = vmul.f32 1.0, %v876
          %v878 = vrcp.pop %v832
          %v879 = vmul.f32 %v832, %v878
          %v880 = vsub.f32 1.0, %v879
          %v881 = vmul.f32 %v878, %v880
          %v882 = vadd.f32 %v878, %v881
          %vm883 = vweird.f32 %v832
          %vm884 = vweird.f32 %v878
          %vm885 = vmor %vm883, %vm884
          %v886 = vsel %vm885, %v878, %v882
          %v887 = vand.u32 2147483647, %v832
          %vm888 = vcmp.eq.f32.partialorder %v887, 8.507059e+37
          %v889 = vand.u32 %v832, 2147483648
          %v890 = vor.u32 1.1754944e-38, %v889
          %v891 = vsel %vm888, %v890, %v886
          %v892 = vmul.f32 1.0, %v891
          %v893 = vrcp.pop %v833
          %v894 = vmul.f32 %v833, %v893
          %v895 = vsub.f32 1.0, %v894
          %v896 = vmul.f32 %v893, %v895
          %v897 = vadd.f32 %v893, %v896
          %vm898 = vweird.f32 %v833
          %vm899 = vweird.f32 %v893
          %vm900 = vmor %vm898, %vm899
          %v901 = vsel %vm900, %v893, %v897
          %v902 = vand.u32 2147483647, %v833
          %vm903 = vcmp.eq.f32.partialorder %v902, 8.507059e+37
          %v904 = vand.u32 %v833, 2147483648
          %v905 = vor.u32 1.1754944e-38, %v904
          %v906 = vsel %vm903, %v905, %v901
          %v907 = vmul.f32 1.0, %v906
          %v908 = vrcp.pop %v834
          %v909 = vmul.f32 %v834, %v908
          %v910 = vsub.f32 1.0, %v909
          %v911 = vmul.f32 %v908, %v910
          %v912 = vadd.f32 %v908, %v911
          %vm913 = vweird.f32 %v834
          %vm914 = vweird.f32 %v908
          %vm915 = vmor %vm913, %vm914
          %v916 = vsel %vm915, %v908, %v912
          %v917 = vand.u32 2147483647, %v834
          %vm918 = vcmp.eq.f32.partialorder %v917, 8.507059e+37
          %v919 = vand.u32 %v834, 2147483648
          %v920 = vor.u32 1.1754944e-38, %v919
          %v921 = vsel %vm918, %v920, %v916
          %v922 = vmul.f32 1.0, %v921
          %v923 = vrcp.pop %v835
          %v924 = vmul.f32 %v835, %v923
          %v925 = vsub.f32 1.0, %v924
          %v926 = vmul.f32 %v923, %v925
          %v927 = vadd.f32 %v923, %v926
          %vm928 = vweird.f32 %v835
          %vm929 = vweird.f32 %v923
          %vm930 = vmor %vm928, %vm929
          %v931 = vsel %vm930, %v923, %v927
          %v932 = vand.u32 2147483647, %v835
          %vm933 = vcmp.eq.f32.partialorder %v932, 8.507059e+37
          %v934 = vand.u32 %v835, 2147483648
          %v935 = vor.u32 1.1754944e-38, %v934
          %v936 = vsel %vm933, %v935, %v931
          %v937 = vmul.f32 1.0, %v936
          %v938 = vrcp.pop %v836
          %v939 = vmul.f32 %v836, %v938
          %v940 = vsub.f32 1.0, %v939
          %v941 = vmul.f32 %v938, %v940
          %v942 = vadd.f32 %v938, %v941
          %vm943 = vweird.f32 %v836
          %vm944 = vweird.f32 %v938
          %vm945 = vmor %vm943, %vm944
          %v946 = vsel %vm945, %v938, %v942
          %v947 = vand.u32 2147483647, %v836
          %vm948 = vcmp.eq.f32.partialorder %v947, 8.507059e+37
          %v949 = vand.u32 %v836, 2147483648
          %v950 = vor.u32 1.1754944e-38, %v949
          %v951 = vsel %vm948, %v950, %v946
          %v952 = vmul.f32 1.0, %v951
          %v953 = vrcp.pop %v837
          %v954 = vmul.f32 %v837, %v953
          %v955 = vsub.f32 1.0, %v954
          %v956 = vmul.f32 %v953, %v955
          %v957 = vadd.f32 %v953, %v956
          %vm958 = vweird.f32 %v837
          %vm959 = vweird.f32 %v953
          %vm960 = vmor %vm958, %vm959
          %v961 = vsel %vm960, %v953, %v957
          %v962 = vand.u32 2147483647, %v837
          %vm963 = vcmp.eq.f32.partialorder %v962, 8.507059e+37
          %v964 = vand.u32 %v837, 2147483648
          %v965 = vor.u32 1.1754944e-38, %v964
          %v966 = vsel %vm963, %v965, %v961
          %v967 = vmul.f32 1.0, %v966
          %v968 = vrcp.pop %v838
          %v969 = vmul.f32 %v838, %v968
          %v970 = vsub.f32 1.0, %v969
          %v971 = vmul.f32 %v968, %v970
          %v972 = vadd.f32 %v968, %v971
          %vm973 = vweird.f32 %v838
          %vm974 = vweird.f32 %v968
          %vm975 = vmor %vm973, %vm974
          %v976 = vsel %vm975, %v968, %v972
          %v977 = vand.u32 2147483647, %v838
          %vm978 = vcmp.eq.f32.partialorder %v977, 8.507059e+37
          %v979 = vand.u32 %v838, 2147483648
          %v980 = vor.u32 1.1754944e-38, %v979
          %v981 = vsel %vm978, %v980, %v976
          %v982 = vmul.f32 1.0, %v981
          %v983 = vrcp.pop %v839
          %v984 = vmul.f32 %v839, %v983
          %v985 = vsub.f32 1.0, %v984
          %v986 = vmul.f32 %v983, %v985
          %v987 = vadd.f32 %v983, %v986
          %vm988 = vweird.f32 %v839
          %vm989 = vweird.f32 %v983
          %vm990 = vmor %vm988, %vm989
          %v991 = vsel %vm990, %v983, %v987
          %v992 = vand.u32 2147483647, %v839
          %vm993 = vcmp.eq.f32.partialorder %v992, 8.507059e+37
          %v994 = vand.u32 %v839, 2147483648
          %v995 = vor.u32 1.1754944e-38, %v994
          %v996 = vsel %vm993, %v995, %v991
          %v997 = vmul.f32 1.0, %v996
          %v998 = vrcp.pop %v840
          %v999 = vmul.f32 %v840, %v998
          %v1000 = vsub.f32 1.0, %v999
          %v1001 = vmul.f32 %v998, %v1000
          %v1002 = vadd.f32 %v998, %v1001
          %vm1003 = vweird.f32 %v840
          %vm1004 = vweird.f32 %v998
          %vm1005 = vmor %vm1003, %vm1004
          %v1006 = vsel %vm1005, %v998, %v1002
          %v1007 = vand.u32 2147483647, %v840
          %vm1008 = vcmp.eq.f32.partialorder %v1007, 8.507059e+37
          %v1009 = vand.u32 %v840, 2147483648
          %v1010 = vor.u32 1.1754944e-38, %v1009
          %v1011 = vsel %vm1008, %v1010, %v1006
          %v1012 = vmul.f32 1.0, %v1011
          %v1013 = vrcp.pop %v841
          %v1014 = vmul.f32 %v841, %v1013
          %v1015 = vsub.f32 1.0, %v1014
          %v1016 = vmul.f32 %v1013, %v1015
          %v1017 = vadd.f32 %v1013, %v1016
          %vm1018 = vweird.f32 %v841
          %vm1019 = vweird.f32 %v1013
          %vm1020 = vmor %vm1018, %vm1019
          %v1021 = vsel %vm1020, %v1013, %v1017
          %v1022 = vand.u32 2147483647, %v841
          %vm1023 = vcmp.eq.f32.partialorder %v1022, 8.507059e+37
          %v1024 = vand.u32 %v841, 2147483648
          %v1025 = vor.u32 1.1754944e-38, %v1024
          %v1026 = vsel %vm1023, %v1025, %v1021
          %v1027 = vmul.f32 1.0, %v1026
          %v1028 = vrcp.pop %v842
          %v1029 = vmul.f32 %v842, %v1028
          %v1030 = vsub.f32 1.0, %v1029
          %v1031 = vmul.f32 %v1028, %v1030
          %v1032 = vadd.f32 %v1028, %v1031
          %vm1033 = vweird.f32 %v842
          %vm1034 = vweird.f32 %v1028
          %vm1035 = vmor %vm1033, %vm1034
          %v1036 = vsel %vm1035, %v1028, %v1032
          %v1037 = vand.u32 2147483647, %v842
          %vm1038 = vcmp.eq.f32.partialorder %v1037, 8.507059e+37
          %v1039 = vand.u32 %v842, 2147483648
          %v1040 = vor.u32 1.1754944e-38, %v1039
          %v1041 = vsel %vm1038, %v1040, %v1036
          %v1042 = vmul.f32 1.0, %v1041
          %v1043 = vrcp.pop %v843
          %v1044 = vmul.f32 %v843, %v1043
          %v1045 = vsub.f32 1.0, %v1044
          %v1046 = vmul.f32 %v1043, %v1045
          %v1047 = vadd.f32 %v1043, %v1046
          %vm1048 = vweird.f32 %v843
          %vm1049 = vweird.f32 %v1043
          %vm1050 = vmor %vm1048, %vm1049
          %v1051 = vsel %vm1050, %v1043, %v1047
          %v1052 = vand.u32 2147483647, %v843
          %vm1053 = vcmp.eq.f32.partialorder %v1052, 8.507059e+37
          %v1054 = vand.u32 %v843, 2147483648
          %v1055 = vor.u32 1.1754944e-38, %v1054
          %v1056 = vsel %vm1053, %v1055, %v1051
          %v1057 = vmul.f32 1.0, %v1056
          %v1058 = vrcp.pop %v844
          %v1059 = vmul.f32 %v844, %v1058
          %v1060 = vsub.f32 1.0, %v1059
          %v1061 = vmul.f32 %v1058, %v1060
          %v1062 = vadd.f32 %v1058, %v1061
          %vm1063 = vweird.f32 %v844
          %vm1064 = vweird.f32 %v1058
          %vm1065 = vmor %vm1063, %vm1064
          %v1066 = vsel %vm1065, %v1058, %v1062
          %v1067 = vand.u32 2147483647, %v844
          %vm1068 = vcmp.eq.f32.partialorder %v1067, 8.507059e+37
          %v1069 = vand.u32 %v844, 2147483648
          %v1070 = vor.u32 1.1754944e-38, %v1069
          %v1071 = vsel %vm1068, %v1070, %v1066
          %v1072 = vmul.f32 1.0, %v1071
          %v1073 = vrcp.pop %v845
          %v1074 = vmul.f32 %v845, %v1073
          %v1075 = vsub.f32 1.0, %v1074
          %v1076 = vmul.f32 %v1073, %v1075
          %v1077 = vadd.f32 %v1073, %v1076
          %vm1078 = vweird.f32 %v845
          %vm1079 = vweird.f32 %v1073
          %vm1080 = vmor %vm1078, %vm1079
          %v1081 = vsel %vm1080, %v1073, %v1077
          %v1082 = vand.u32 2147483647, %v845
          %vm1083 = vcmp.eq.f32.partialorder %v1082, 8.507059e+37
          %v1084 = vand.u32 %v845, 2147483648
          %v1085 = vor.u32 1.1754944e-38, %v1084
          %v1086 = vsel %vm1083, %v1085, %v1081
          %v1087 = vmul.f32 1.0, %v1086
          %v1088 = vrcp.pop %v846
          %v1089 = vmul.f32 %v846, %v1088
          %v1090 = vsub.f32 1.0, %v1089
          %v1091 = vmul.f32 %v1088, %v1090
          %v1092 = vadd.f32 %v1088, %v1091
          %vm1093 = vweird.f32 %v846
          %vm1094 = vweird.f32 %v1088
          %vm1095 = vmor %vm1093, %vm1094
          %v1096 = vsel %vm1095, %v1088, %v1092
          %v1097 = vand.u32 2147483647, %v846
          %vm1098 = vcmp.eq.f32.partialorder %v1097, 8.507059e+37
          %v1099 = vand.u32 %v846, 2147483648
          %v1100 = vor.u32 1.1754944e-38, %v1099
          %v1101 = vsel %vm1098, %v1100, %v1096
          %v1102 = vmul.f32 1.0, %v1101
          %v1103 = vrcp.pop %v847
          %v1104 = vmul.f32 %v847, %v1103
          %v1105 = vsub.f32 1.0, %v1104
          %v1106 = vmul.f32 %v1103, %v1105
          %v1107 = vadd.f32 %v1103, %v1106
          %vm1108 = vweird.f32 %v847
          %vm1109 = vweird.f32 %v1103
          %vm1110 = vmor %vm1108, %vm1109
          %v1111 = vsel %vm1110, %v1103, %v1107
          %v1112 = vand.u32 2147483647, %v847
          %vm1113 = vcmp.eq.f32.partialorder %v1112, 8.507059e+37
          %v1114 = vand.u32 %v847, 2147483648
          %v1115 = vor.u32 1.1754944e-38, %v1114
          %v1116 = vsel %vm1113, %v1115, %v1111
          %v1117 = vmul.f32 1.0, %v1116
          %v1118 = vrcp.pop %v848
          %v1119 = vmul.f32 %v848, %v1118
          %v1120 = vsub.f32 1.0, %v1119
          %v1121 = vmul.f32 %v1118, %v1120
          %v1122 = vadd.f32 %v1118, %v1121
          %vm1123 = vweird.f32 %v848
          %vm1124 = vweird.f32 %v1118
          %vm1125 = vmor %vm1123, %vm1124
          %v1126 = vsel %vm1125, %v1118, %v1122
          %v1127 = vand.u32 2147483647, %v848
          %vm1128 = vcmp.eq.f32.partialorder %v1127, 8.507059e+37
          %v1129 = vand.u32 %v848, 2147483648
          %v1130 = vor.u32 1.1754944e-38, %v1129
          %v1131 = vsel %vm1128, %v1130, %v1126
          %v1132 = vmul.f32 1.0, %v1131
          %v1133 = vrcp.pop %v849
          %v1134 = vmul.f32 %v849, %v1133
          %v1135 = vsub.f32 1.0, %v1134
          %v1136 = vmul.f32 %v1133, %v1135
          %v1137 = vadd.f32 %v1133, %v1136
          %vm1138 = vweird.f32 %v849
          %vm1139 = vweird.f32 %v1133
          %vm1140 = vmor %vm1138, %vm1139
          %v1141 = vsel %vm1140, %v1133, %v1137
          %v1142 = vand.u32 2147483647, %v849
          %vm1143 = vcmp.eq.f32.partialorder %v1142, 8.507059e+37
          %v1144 = vand.u32 %v849, 2147483648
          %v1145 = vor.u32 1.1754944e-38, %v1144
          %v1146 = vsel %vm1143, %v1145, %v1141
          %v1147 = vmul.f32 1.0, %v1146
          %v1148 = vrcp.pop %v850
          %v1149 = vmul.f32 %v850, %v1148
          %v1150 = vsub.f32 1.0, %v1149
          %v1151 = vmul.f32 %v1148, %v1150
          %v1152 = vadd.f32 %v1148, %v1151
          %vm1153 = vweird.f32 %v850
          %vm1154 = vweird.f32 %v1148
          %vm1155 = vmor %vm1153, %vm1154
          %v1156 = vsel %vm1155, %v1148, %v1152
          %v1157 = vand.u32 2147483647, %v850
          %vm1158 = vcmp.eq.f32.partialorder %v1157, 8.507059e+37
          %v1159 = vand.u32 %v850, 2147483648
          %v1160 = vor.u32 1.1754944e-38, %v1159
          %v1161 = vsel %vm1158, %v1160, %v1156
          %v1162 = vmul.f32 1.0, %v1161
          %v1163 = vrcp.pop %v851
          %v1164 = vmul.f32 %v851, %v1163
          %v1165 = vsub.f32 1.0, %v1164
          %v1166 = vmul.f32 %v1163, %v1165
          %v1167 = vadd.f32 %v1163, %v1166
          %vm1168 = vweird.f32 %v851
          %vm1169 = vweird.f32 %v1163
          %vm1170 = vmor %vm1168, %vm1169
          %v1171 = vsel %vm1170, %v1163, %v1167
          %v1172 = vand.u32 2147483647, %v851
          %vm1173 = vcmp.eq.f32.partialorder %v1172, 8.507059e+37
          %v1174 = vand.u32 %v851, 2147483648
          %v1175 = vor.u32 1.1754944e-38, %v1174
          %v1176 = vsel %vm1173, %v1175, %v1171
          %v1177 = vmul.f32 1.0, %v1176
          %v1178 = vrcp.pop %v852
          %v1179 = vmul.f32 %v852, %v1178
          %v1180 = vsub.f32 1.0, %v1179
          %v1181 = vmul.f32 %v1178, %v1180
          %v1182 = vadd.f32 %v1178, %v1181
          %vm1183 = vweird.f32 %v852
          %vm1184 = vweird.f32 %v1178
          %vm1185 = vmor %vm1183, %vm1184
          %v1186 = vsel %vm1185, %v1178, %v1182
          %v1187 = vand.u32 2147483647, %v852
          %vm1188 = vcmp.eq.f32.partialorder %v1187, 8.507059e+37
          %v1189 = vand.u32 %v852, 2147483648
          %v1190 = vor.u32 1.1754944e-38, %v1189
          %v1191 = vsel %vm1188, %v1190, %v1186
          %v1192 = vmul.f32 1.0, %v1191
          %v1193 = vrcp.pop %v853
          %v1194 = vmul.f32 %v853, %v1193
          %v1195 = vsub.f32 1.0, %v1194
          %v1196 = vmul.f32 %v1193, %v1195
          %v1197 = vadd.f32 %v1193, %v1196
          %vm1198 = vweird.f32 %v853
          %vm1199 = vweird.f32 %v1193
          %vm1200 = vmor %vm1198, %vm1199
          %v1201 = vsel %vm1200, %v1193, %v1197
          %v1202 = vand.u32 2147483647, %v853
          %vm1203 = vcmp.eq.f32.partialorder %v1202, 8.507059e+37
          %v1204 = vand.u32 %v853, 2147483648
          %v1205 = vor.u32 1.1754944e-38, %v1204
          %v1206 = vsel %vm1203, %v1205, %v1201
          %v1207 = vmul.f32 1.0, %v1206
          %v1208 = vrcp.pop %v854
          %v1209 = vmul.f32 %v854, %v1208
          %v1210 = vsub.f32 1.0, %v1209
          %v1211 = vmul.f32 %v1208, %v1210
          %v1212 = vadd.f32 %v1208, %v1211
          %vm1213 = vweird.f32 %v854
          %vm1214 = vweird.f32 %v1208
          %vm1215 = vmor %vm1213, %vm1214
          %v1216 = vsel %vm1215, %v1208, %v1212
          %v1217 = vand.u32 2147483647, %v854
          %vm1218 = vcmp.eq.f32.partialorder %v1217, 8.507059e+37
          %v1219 = vand.u32 %v854, 2147483648
          %v1220 = vor.u32 1.1754944e-38, %v1219
          %v1221 = vsel %vm1218, %v1220, %v1216
          %v1222 = vmul.f32 1.0, %v1221
          %v1223 = vrcp.pop %v855
          %v1224 = vmul.f32 %v855, %v1223
          %v1225 = vsub.f32 1.0, %v1224
          %v1226 = vmul.f32 %v1223, %v1225
          %v1227 = vadd.f32 %v1223, %v1226
          %vm1228 = vweird.f32 %v855
          %vm1229 = vweird.f32 %v1223
          %vm1230 = vmor %vm1228, %vm1229
          %v1231 = vsel %vm1230, %v1223, %v1227
          %v1232 = vand.u32 2147483647, %v855
          %vm1233 = vcmp.eq.f32.partialorder %v1232, 8.507059e+37
          %v1234 = vand.u32 %v855, 2147483648
          %v1235 = vor.u32 1.1754944e-38, %v1234
          %v1236 = vsel %vm1233, %v1235, %v1231
          %v1237 = vmul.f32 1.0, %v1236
          %v1238 = vrcp.pop %v856
          %v1239 = vmul.f32 %v856, %v1238
          %v1240 = vsub.f32 1.0, %v1239
          %v1241 = vmul.f32 %v1238, %v1240
          %v1242 = vadd.f32 %v1238, %v1241
          %vm1243 = vweird.f32 %v856
          %vm1244 = vweird.f32 %v1238
          %vm1245 = vmor %vm1243, %vm1244
          %v1246 = vsel %vm1245, %v1238, %v1242
          %v1247 = vand.u32 2147483647, %v856
          %vm1248 = vcmp.eq.f32.partialorder %v1247, 8.507059e+37
          %v1249 = vand.u32 %v856, 2147483648
          %v1250 = vor.u32 1.1754944e-38, %v1249
          %v1251 = vsel %vm1248, %v1250, %v1246
          %v1252 = vmul.f32 1.0, %v1251
          %v1253 = vrcp.pop %v857
          %v1254 = vmul.f32 %v857, %v1253
          %v1255 = vsub.f32 1.0, %v1254
          %v1256 = vmul.f32 %v1253, %v1255
          %v1257 = vadd.f32 %v1253, %v1256
          %vm1258 = vweird.f32 %v857
          %vm1259 = vweird.f32 %v1253
          %vm1260 = vmor %vm1258, %vm1259
          %v1261 = vsel %vm1260, %v1253, %v1257
          %v1262 = vand.u32 2147483647, %v857
          %vm1263 = vcmp.eq.f32.partialorder %v1262, 8.507059e+37
          %v1264 = vand.u32 %v857, 2147483648
          %v1265 = vor.u32 1.1754944e-38, %v1264
          %v1266 = vsel %vm1263, %v1265, %v1261
          %v1267 = vmul.f32 1.0, %v1266
          %v1268 = vrcp.pop %v858
          %v1269 = vmul.f32 %v858, %v1268
          %v1270 = vsub.f32 1.0, %v1269
          %v1271 = vmul.f32 %v1268, %v1270
          %v1272 = vadd.f32 %v1268, %v1271
          %vm1273 = vweird.f32 %v858
          %vm1274 = vweird.f32 %v1268
          %vm1275 = vmor %vm1273, %vm1274
          %v1276 = vsel %vm1275, %v1268, %v1272
          %v1277 = vand.u32 2147483647, %v858
          %vm1278 = vcmp.eq.f32.partialorder %v1277, 8.507059e+37
          %v1279 = vand.u32 %v858, 2147483648
          %v1280 = vor.u32 1.1754944e-38, %v1279
          %v1281 = vsel %vm1278, %v1280, %v1276
          %v1282 = vmul.f32 1.0, %v1281
          %v1283 = vrcp.pop %v859
          %v1284 = vmul.f32 %v859, %v1283
          %v1285 = vsub.f32 1.0, %v1284
          %v1286 = vmul.f32 %v1283, %v1285
          %v1287 = vadd.f32 %v1283, %v1286
          %vm1288 = vweird.f32 %v859
          %vm1289 = vweird.f32 %v1283
          %vm1290 = vmor %vm1288, %vm1289
          %v1291 = vsel %vm1290, %v1283, %v1287
          %v1292 = vand.u32 2147483647, %v859
          %vm1293 = vcmp.eq.f32.partialorder %v1292, 8.507059e+37
          %v1294 = vand.u32 %v859, 2147483648
          %v1295 = vor.u32 1.1754944e-38, %v1294
          %v1296 = vsel %vm1293, %v1295, %v1291
          %v1297 = vmul.f32 1.0, %v1296
          %v1298 = vrcp.pop %v860
          %v1299 = vmul.f32 %v860, %v1298
          %v1300 = vsub.f32 1.0, %v1299
          %v1301 = vmul.f32 %v1298, %v1300
          %v1302 = vadd.f32 %v1298, %v1301
          %vm1303 = vweird.f32 %v860
          %vm1304 = vweird.f32 %v1298
          %vm1305 = vmor %vm1303, %vm1304
          %v1306 = vsel %vm1305, %v1298, %v1302
          %v1307 = vand.u32 2147483647, %v860
          %vm1308 = vcmp.eq.f32.partialorder %v1307, 8.507059e+37
          %v1309 = vand.u32 %v860, 2147483648
          %v1310 = vor.u32 1.1754944e-38, %v1309
          %v1311 = vsel %vm1308, %v1310, %v1306
          %v1312 = vmul.f32 1.0, %v1311
          %v1313 = vrcp.pop %v861
          %v1314 = vmul.f32 %v861, %v1313
          %v1315 = vsub.f32 1.0, %v1314
          %v1316 = vmul.f32 %v1313, %v1315
          %v1317 = vadd.f32 %v1313, %v1316
          %vm1318 = vweird.f32 %v861
          %vm1319 = vweird.f32 %v1313
          %vm1320 = vmor %vm1318, %vm1319
          %v1321 = vsel %vm1320, %v1313, %v1317
          %v1322 = vand.u32 2147483647, %v861
          %vm1323 = vcmp.eq.f32.partialorder %v1322, 8.507059e+37
          %v1324 = vand.u32 %v861, 2147483648
          %v1325 = vor.u32 1.1754944e-38, %v1324
          %v1326 = vsel %vm1323, %v1325, %v1321
          %v1327 = vmul.f32 1.0, %v1326
          %v1328 = vrcp.pop %v862
          %v1329 = vmul.f32 %v862, %v1328
          %v1330 = vsub.f32 1.0, %v1329
          %v1331 = vmul.f32 %v1328, %v1330
          %v1332 = vadd.f32 %v1328, %v1331
          %vm1333 = vweird.f32 %v862
          %vm1334 = vweird.f32 %v1328
          %vm1335 = vmor %vm1333, %vm1334
          %v1336 = vsel %vm1335, %v1328, %v1332
          %v1337 = vand.u32 2147483647, %v862
          %vm1338 = vcmp.eq.f32.partialorder %v1337, 8.507059e+37
          %v1339 = vand.u32 %v862, 2147483648
          %v1340 = vor.u32 1.1754944e-38, %v1339
          %v1341 = vsel %vm1338, %v1340, %v1336
          %v1342 = vmul.f32 1.0, %v1341
          %v1343 = vmul.f32 %v703, %v877
          %v1344 = vmul.f32 %v704, %v892
          %v1345 = vmul.f32 %v705, %v907
          %v1346 = vmul.f32 %v706, %v922
          %v1347 = vmul.f32 %v707, %v937
          %v1348 = vmul.f32 %v708, %v952
          %v1349 = vmul.f32 %v709, %v967
          %v1350 = vmul.f32 %v710, %v982
          %v1351 = vmul.f32 %v711, %v997
          %v1352 = vmul.f32 %v712, %v1012
          %v1353 = vmul.f32 %v713, %v1027
          %v1354 = vmul.f32 %v714, %v1042
          %v1355 = vmul.f32 %v715, %v1057
          %v1356 = vmul.f32 %v716, %v1072
          %v1357 = vmul.f32 %v717, %v1087
          %v1358 = vmul.f32 %v718, %v1102
          %v1359 = vmul.f32 %v719, %v1117
          %v1360 = vmul.f32 %v720, %v1132
          %v1361 = vmul.f32 %v721, %v1147
          %v1362 = vmul.f32 %v722, %v1162
          %v1363 = vmul.f32 %v723, %v1177
          %v1364 = vmul.f32 %v724, %v1192
          %v1365 = vmul.f32 %v725, %v1207
          %v1366 = vmul.f32 %v726, %v1222
          %v1367 = vmul.f32 %v727, %v1237
          %v1368 = vmul.f32 %v728, %v1252
          %v1369 = vmul.f32 %v729, %v1267
          %v1370 = vmul.f32 %v730, %v1282
          %v1371 = vmul.f32 %v731, %v1297
          %v1372 = vmul.f32 %v732, %v1312
          %v1373 = vmul.f32 %v733, %v1327
          %v1374 = vmul.f32 %v734, %v1342
          %v1375 = vpack.c.bf16 %v1343, %v1343
          %v1376 = vpack.c.bf16 %v1344, %v1344
          %v1377 = vpack.c.bf16 %v1345, %v1345
          %v1378 = vpack.c.bf16 %v1346, %v1346
          %v1379 = vpack.c.bf16 %v1347, %v1347
          %v1380 = vpack.c.bf16 %v1348, %v1348
          %v1381 = vpack.c.bf16 %v1349, %v1349
          %v1382 = vpack.c.bf16 %v1350, %v1350
          %v1383 = vpack.c.bf16 %v1351, %v1351
          %v1384 = vpack.c.bf16 %v1352, %v1352
          %v1385 = vpack.c.bf16 %v1353, %v1353
          %v1386 = vpack.c.bf16 %v1354, %v1354
          %v1387 = vpack.c.bf16 %v1355, %v1355
          %v1388 = vpack.c.bf16 %v1356, %v1356
          %v1389 = vpack.c.bf16 %v1357, %v1357
          %v1390 = vpack.c.bf16 %v1358, %v1358
          %v1391 = vpack.c.bf16 %v1359, %v1359
          %v1392 = vpack.c.bf16 %v1360, %v1360
          %v1393 = vpack.c.bf16 %v1361, %v1361
          %v1394 = vpack.c.bf16 %v1362, %v1362
          %v1395 = vpack.c.bf16 %v1363, %v1363
          %v1396 = vpack.c.bf16 %v1364, %v1364
          %v1397 = vpack.c.bf16 %v1365, %v1365
          %v1398 = vpack.c.bf16 %v1366, %v1366
          %v1399 = vpack.c.bf16 %v1367, %v1367
          %v1400 = vpack.c.bf16 %v1368, %v1368
          %v1401 = vpack.c.bf16 %v1369, %v1369
          %v1402 = vpack.c.bf16 %v1370, %v1370
          %v1403 = vpack.c.bf16 %v1371, %v1371
          %v1404 = vpack.c.bf16 %v1372, %v1372
          %v1405 = vpack.c.bf16 %v1373, %v1373
          %v1406 = vpack.c.bf16 %v1374, %v1374
          %1407 = vst [vmem:[%s228] sm:$0xf] %v1375
          %1408 = vst [vmem:[%s228 + $0x4] sm:$0xf] %v1376
          %1409 = vst [vmem:[%s228 + $0x8] sm:$0xf] %v1377
          %1410 = vst [vmem:[%s228 + $0xc] sm:$0xf] %v1378
          %1411 = vst [vmem:[%s228 + $0x10] sm:$0xf] %v1379
          %1412 = vst [vmem:[%s228 + $0x14] sm:$0xf] %v1380
          %1413 = vst [vmem:[%s228 + $0x18] sm:$0xf] %v1381
          %1414 = vst [vmem:[%s228 + $0x1c] sm:$0xf] %v1382
          %1415 = vst [vmem:[%s228 + $0x20] sm:$0xf] %v1383
          %1416 = vst [vmem:[%s228 + $0x24] sm:$0xf] %v1384
          %1417 = vst [vmem:[%s228 + $0x28] sm:$0xf] %v1385
          %1418 = vst [vmem:[%s228 + $0x2c] sm:$0xf] %v1386
          %1419 = vst [vmem:[%s228 + $0x30] sm:$0xf] %v1387
          %1420 = vst [vmem:[%s228 + $0x34] sm:$0xf] %v1388
          %1421 = vst [vmem:[%s228 + $0x38] sm:$0xf] %v1389
          %1422 = vst [vmem:[%s228 + $0x3c] sm:$0xf] %v1390
          %1423 = vst [vmem:[%s228 + $0x40] sm:$0xf] %v1391
          %1424 = vst [vmem:[%s228 + $0x44] sm:$0xf] %v1392
          %1425 = vst [vmem:[%s228 + $0x48] sm:$0xf] %v1393
          %1426 = vst [vmem:[%s228 + $0x4c] sm:$0xf] %v1394
          %1427 = vst [vmem:[%s228 + $0x50] sm:$0xf] %v1395
          %1428 = vst [vmem:[%s228 + $0x54] sm:$0xf] %v1396
          %1429 = vst [vmem:[%s228 + $0x58] sm:$0xf] %v1397
          %1430 = vst [vmem:[%s228 + $0x5c] sm:$0xf] %v1398
          %1431 = vst [vmem:[%s228 + $0x60] sm:$0xf] %v1399
          %1432 = vst [vmem:[%s228 + $0x64] sm:$0xf] %v1400
          %1433 = vst [vmem:[%s228 + $0x68] sm:$0xf] %v1401
          %1434 = vst [vmem:[%s228 + $0x6c] sm:$0xf] %v1402
          %1435 = vst [vmem:[%s228 + $0x70] sm:$0xf] %v1403
          %1436 = vst [vmem:[%s228 + $0x74] sm:$0xf] %v1404
          %1437 = vst [vmem:[%s228 + $0x78] sm:$0xf] %v1405
          %1438 = vst [vmem:[%s228 + $0x7c] sm:$0xf] %v1406
        $region40: #{pallas_matmul.1} parent=31 // pred_fallthru
          _
        %s1439 = sand.u32 %s128, 1
        %s1440 = scalar_lea.sflag [#allocation4], %s1439
        %s1441 = sand.u32 %s128, 1
        %s1442 = smul.addr %s1441, 128
        %s1443 = scalar_lea.vmem [#allocation3], %s1442
        // Predicated region
        $region41: #{pallas_matmul.1} parent=31 // pred_check
          %p1444 = pneg %p138
        $region42: #{pallas_matmul.1} parent=31 // pred_check_branch
          %1446 = sbr.rel (%p1444) target = $region44
        $region43: #{pallas_matmul.1} parent=31 // pred_region
          %s1447 = smul.u32 32, %s22
          %1449 = vsyncadd %s1440, 0
          %s1450 = sadd.s32 %s23, %s1447
          %s1451 = smul.addr %s1450, 4
          %s1452 = scalar_lea.hbm %s3, %s1451
          %s1453 = sshll.u32 %s1443, 4
          %s1454 = int_to_ptr.vmem [resolvable:$true] %s1453
          %s1455 = sshll.u32 %s1452, 4
          %s1456 = int_to_ptr.hbm [resolvable:$true] %s1455
          %1461 = dma.vmem_to_hbm [thread:$0]  %s1454, 2048, %s1456, %s1440, 64, 64, 4
        $region44: #{pallas_matmul.1} parent=31 // pred_fallthru
          _
      $region32: #{pallas_matmul.1} parent=5 // pred_fallthru
        _
      %p1462 = scmp.le.s32.totalorder 2, %s12
      // Predicated region
      $region45: #{pallas_matmul.1} parent=5 // pred_check
        %p1463 = pneg %p1462
      $region46: #{pallas_matmul.1} parent=5 // pred_check_branch
        %1465 = sbr.rel (%p1463) target = $region48
      $region47: #{pallas_matmul.1} parent=5 // pred_region
        %s1466 = ssub.s32 %s12, 2
        // Predicated region
        $region49: #{pallas_matmul.1} parent=47 // pred_check
          %p1467 = pneg %p144
        $region50: #{pallas_matmul.1} parent=47 // pred_check_branch
          %1469 = sbr.rel (%p1467) target = $region52
        $region51: #{pallas_matmul.1} parent=47 // pred_region
          %s1470 = sand.u32 %s129, 1
          %s1471 = scalar_lea.sflag [#allocation4], %s1470
          %s1472 = sand.u32 %s129, 1
          %s1473 = smul.addr %s1472, 128
          %s1474 = scalar_lea.vmem [#allocation3], %s1473
          %1476 = dma.done %s1471, 2048
        $region52: #{pallas_matmul.1} parent=47 // pred_fallthru
          _
      $region48: #{pallas_matmul.1} parent=5 // pred_fallthru
        _
    $region6: #{pallas_matmul.1} parent=1 // loop_footer
      %s16 = sadd.s32 1, %s12
    $region7: #{pallas_matmul.1} parent=1 // loop_footer_branch
      %11 = sbr.rel target = $region3
    $region8: #{pallas_matmul.1} parent=1 // loop_exit
      _
    %1477 = vsyncpa [#allocation4], 1
    %s1478 = scalar_lea.sflag [#allocation4], 1
    %1479 = vsyncpa %s1478, 1

</llo_original>
